<compile_context>
chip_gen: v7x
topology: tpu7x:2x2x1
jax: 0.10.0
libtpu: 0.0.40
codegen_flags: <defaults>
</compile_context>

<pallas_src>
import functools

import numpy as np
import jax
import jax.numpy as jnp
from jax import lax
from jax.experimental import pallas as pl
from jax.experimental.pallas import tpu as pltpu

MAXPAD = 3                    # max(k // 2) over cnn_kernels (3, 5, 7)
KTAPS = 2 * MAXPAD + 1        # 7 taps in the fused conv weight


# ----------------------------------------------------------------------------
# Fused kernel: tap-fused CNN + hoisted x-projections + bidirectional GRU
#               recurrence (single unrolled loop) + final LayerNorm.
# ----------------------------------------------------------------------------
def cnn_bigru_kernel(xtap_ref, wc_ref, bc_ref, wx_ref, bx_ref,
                     g1x_ref, b1x_ref, g2x_ref, b2x_ref,
                     wh_ref, bh_ref,
                     g1h_ref, b1h_ref, g2h_ref, b2h_ref,
                     gf_ref, bf_ref,
                     s_ref, pf_ref, pb_ref,
                     out_ref, xstack, hstack, *, T, B):
    # xtap_ref : (T*B, K*D) bf16  tap-major input: cols j*D:(j+1)*D = x_pad[t+j, b]
    # wc_ref   : (K*D, D)   bf16  fused conv weight (zero outside each kernel window)
    # wx_ref   : (D, 3H)    bf16  [Wxrz | Wxn]^T            bx_ref: (1, 3H) f32
    # wh_ref   : (H, 3H)    f32   [Whrz | Whn]^T            bh_ref: (1, 3H) f32
    # s_ref    : (2TB, TB)  f32   row permutation: xstack = S @ xln
    # pf_ref   : (TB, 2TB)  f32   de-interleave of hstack -> forward outputs
    # pb_ref   : (TB, 2TB)  f32   de-interleave of hstack -> backward outputs
    # out_ref  : (T*B, 2H)  f32   time-major output rows (final LayerNorm applied)
    # xstack   : (2TB, 3H)  f32   scratch: per-step stacked [fwd ; bwd] x-projections
    # hstack   : (2TB, H)   f32   scratch: per-step stacked [fwd ; bwd] hidden states
    TB, H2 = out_ref.shape
    H = H2 // 2
    B2 = 2 * B

    def ln(v, g, b):
        mu = jnp.mean(v, axis=-1, keepdims=True)
        var = jnp.mean(jnp.square(v - mu), axis=-1, keepdims=True)
        return (v - mu) * lax.rsqrt(var + 1e-5) * g + b

    # ---- 1) CNN: ONE bf16 matmul, contraction K*D, lane-dense output (TB, D) ----
    acc = jnp.dot(xtap_ref[...], wc_ref[...],
                  preferred_element_type=jnp.float32) + bc_ref[...]

    # ---- 2) hoisted x-projections + their LayerNorms for ALL timesteps ----
    xp3 = jnp.dot(acc.astype(jnp.bfloat16), wx_ref[...],
                  preferred_element_type=jnp.float32) + bx_ref[...]
    xrz = ln(xp3[:, :H2], g1x_ref[...], b1x_ref[...])      # LNx1(Wxrz(x))
    xn = ln(xp3[:, H2:], g2x_ref[...], b2x_ref[...])       # LNx2(Wxn(x))
    xln = jnp.concatenate([xrz, xn], axis=-1)               # (TB, 3H)

    # ---- 2b) build the stacked (fwd + time-flipped bwd) x rows ONCE ----
    # xstack rows s*2B .. s*2B+B-1    = xln at time s       (forward direction)
    #        rows s*2B+B .. s*2B+2B-1 = xln at time T-1-s   (backward direction)
    xstack[...] = jnp.dot(s_ref[...], xln, preferred_element_type=jnp.float32)

    # ---- 3) fwd + bwd recurrence: ONE unrolled loop on a stacked (2B, H) state ----
    Wh, Bh = wh_ref[...], bh_ref[...]
    G1h, B1h = g1h_ref[...], b1h_ref[...]
    G2h, B2h = g2h_ref[...], b2h_ref[...]

    def step(s, h):
        xs = xstack[pl.ds(s * B2, B2), :]                              # (2B, 3H)
        hp = jnp.dot(h, Wh, preferred_element_type=jnp.float32) + Bh   # (2B, 3H)
        gates = jax.nn.sigmoid(xs[:, :H2] + ln(hp[:, :H2], G1h, B1h))
        rt, zt = gates[:, :H], gates[:, H:]
        nt = jnp.tanh(xs[:, H2:] + rt * ln(hp[:, H2:], G2h, B2h))
        hnew = (1.0 - zt) * nt + zt * h
        hstack[pl.ds(s * B2, B2), :] = hnew                 # single full-row store
        return hnew

    lax.fori_loop(0, T, step, jnp.zeros((B2, H), jnp.float32), unroll=True)

    # ---- 4) de-interleave directions, concat, final LayerNorm (once, all rows) ----
    hs = hstack[...]
    h_f = jnp.dot(pf_ref[...], hs, preferred_element_type=jnp.float32)   # (TB, H)
    h_b = jnp.dot(pb_ref[...], hs, preferred_element_type=jnp.float32)   # (TB, H)
    full = jnp.concatenate([h_f, h_b], axis=-1)                          # (TB, 2H)
    out_ref[...] = ln(full, gf_ref[...], bf_ref[...]).astype(out_ref.dtype)


# ----------------------------------------------------------------------------
# One-time parameter packing (hoisted out of the per-call wrapper).
# ----------------------------------------------------------------------------
def pack_params(params):
    D = params["conv3_w"].shape[1]
    O = params["conv3_w"].shape[0]
    assert D == 3 * O, "input_size must be divisible by len(cnn_kernels)=3"
    H = params["Whn_w"].shape[0]
    H3 = 3 * H

    # Fused tap-major conv weight (K, D, 3O) flattened to (K*D, 3O); column
    # blocks follow the torch.cat order [conv3 | conv5 | conv7]; each block is
    # zero outside its own kernel-size tap window so "same" padding is preserved.
    Wc = jnp.zeros((KTAPS, D, D), jnp.float32)
    col = 0
    for k in (3, 5, 7):
        off = MAXPAD - k // 2
        wk = jnp.transpose(params[f"conv{k}_w"], (2, 1, 0))    # (k, D, O)
        Wc = Wc.at[off:off + k, :, col:col + O].set(wk)
        col += O

    row = lambda v: v.reshape(1, -1)
    packed = {
        "Wc": Wc.reshape(KTAPS * D, D).astype(jnp.bfloat16),
        "bc": jnp.concatenate([params["conv3_b"], params["conv5_b"],
                               params["conv7_b"]]).reshape(1, D),
        "Wx": jnp.concatenate([params["Wxrz_w"].T, params["Wxn_w"].T],
                              axis=1).astype(jnp.bfloat16),
        "bx": jnp.concatenate([params["Wxrz_b"], params["Wxn_b"]]).reshape(1, H3),
        "Wh": jnp.concatenate([params["Whrz_w"].T, params["Whn_w"].T], axis=1),
        "bh": jnp.concatenate([params["Whrz_b"], params["Whn_b"]]).reshape(1, H3),
    }
    for name in ("LNx1", "LNx2", "LNh1", "LNh2", "LNout"):
        packed[f"{name}_g"] = row(params[f"{name}_g"])
        packed[f"{name}_b"] = row(params[f"{name}_b"])
    return packed


def _perm_mats(T, B):
    """0/1 row-permutation matrices (compile-time constants) used in-kernel to
    (a) interleave forward + time-flipped backward x rows and (b) de-interleave
    the stacked hidden states, so the serial loop never concats or half-stores."""
    TB = T * B
    S = np.zeros((2 * TB, TB), np.float32)
    Pf = np.zeros((TB, 2 * TB), np.float32)
    Pb = np.zeros((TB, 2 * TB), np.float32)
    for t in range(T):
        for b in range(B):
            S[t * 2 * B + b, t * B + b] = 1.0                    # fwd x at time t
            S[t * 2 * B + B + b, (T - 1 - t) * B + b] = 1.0      # bwd x at time T-1-t
            Pf[t * B + b, t * 2 * B + b] = 1.0                   # fwd h(t)
            Pb[t * B + b, (T - 1 - t) * 2 * B + B + b] = 1.0     # bwd h(t)
    return jnp.asarray(S), jnp.asarray(Pf), jnp.asarray(Pb)


# ----------------------------------------------------------------------------
# Per-call wrapper (only input layout + pallas_call + output transpose).
# ----------------------------------------------------------------------------
def cnn_bigru_forward(x, packed):
    B, T, D = x.shape
    H3 = packed["Wx"].shape[1]
    H = H3 // 3
    H2 = 2 * H
    TB = T * B

    # Tap-major input layout: xtap[t*B + b, j*D:(j+1)*D] = x_pad[t + j, b, :]
    x_tm = jnp.transpose(x, (1, 0, 2))                               # (T, B, D)
    xpad = jnp.pad(x_tm, ((MAXPAD, MAXPAD), (0, 0), (0, 0)))         # (T+2P, B, D)
    xtap = jnp.concatenate([xpad[j:j + T] for j in range(KTAPS)], axis=-1)
    xtap = xtap.reshape(TB, KTAPS * D).astype(jnp.bfloat16)

    S, Pf, Pb = _perm_mats(T, B)

    vmem = pl.BlockSpec(memory_space=pltpu.MemorySpace.VMEM)
    out_flat = pl.pallas_call(
        functools.partial(cnn_bigru_kernel, T=T, B=B),
        out_shape=jax.ShapeDtypeStruct((TB, H2), jnp.float32),
        in_specs=[vmem] * 20,
        out_specs=vmem,
        scratch_shapes=[pltpu.VMEM((2 * TB, H3), jnp.float32),
                        pltpu.VMEM((2 * TB, H), jnp.float32)],
    )(xtap, packed["Wc"], packed["bc"], packed["Wx"], packed["bx"],
      packed["LNx1_g"], packed["LNx1_b"], packed["LNx2_g"], packed["LNx2_b"],
      packed["Wh"], packed["bh"],
      packed["LNh1_g"], packed["LNh1_b"], packed["LNh2_g"], packed["LNh2_b"],
      packed["LNout_g"], packed["LNout_b"],
      S, Pf, Pb)

    # (T*B, 2H) -> (B, T, 2H); tiny at these sizes.
    return jnp.transpose(out_flat.reshape(T, B, H2), (1, 0, 2))


# ----------------------------------------------------------------------------
# Pure-JAX reference (same math, no Pallas) for validation.
# ----------------------------------------------------------------------------
def reference_forward(x, params):
    B, T, D = x.shape
    O = D // 3
    H = params["Whn_w"].shape[0]

    def ln(v, g, b):
        mu = jnp.mean(v, axis=-1, keepdims=True)
        var = jnp.mean(jnp.square(v - mu), axis=-1, keepdims=True)
        return (v - mu) / jnp.sqrt(var + 1e-5) * g + b

    outs = []
    for k in (3, 5, 7):
        w, bvec = params[f"conv{k}_w"], params[f"conv{k}_b"]      # (O, D, k), (O,)
        pad = k // 2
        xp = jnp.pad(x, ((0, 0), (pad, pad), (0, 0)))
        acc = jnp.zeros((B, T, O), jnp.float32)
        for j in range(k):
            acc = acc + jnp.einsum("btc,oc->bto", xp[:, j:j + T, :], w[:, :, j])
        outs.append(acc + bvec)
    cnn_out = jnp.concatenate(outs, axis=-1)                      # (B, T, D)

    def recurrence(xt, h):
        xrz = ln(xt @ params["Wxrz_w"].T + params["Wxrz_b"], params["LNx1_g"], params["LNx1_b"])
        hrz = ln(h @ params["Whrz_w"].T + params["Whrz_b"], params["LNh1_g"], params["LNh1_b"])
        gates = jax.nn.sigmoid(xrz + hrz)
        rt, zt = gates[:, :H], gates[:, H:]
        xn = ln(xt @ params["Wxn_w"].T + params["Wxn_b"], params["LNx2_g"], params["LNx2_b"])
        hn = ln(h @ params["Whn_w"].T + params["Whn_b"], params["LNh2_g"], params["LNh2_b"])
        nt = jnp.tanh(xn + rt * hn)
        return (1.0 - zt) * nt + zt * h

    x_tbd = jnp.transpose(cnn_out, (1, 0, 2))
    h0 = jnp.zeros((B, H), jnp.float32)
    step = lambda h, xt: (recurrence(xt, h),) * 2
    _, fwd = lax.scan(step, h0, x_tbd)
    _, bwd = lax.scan(step, h0, x_tbd, reverse=True)
    out = jnp.concatenate([fwd, bwd], axis=-1)
    out = jnp.transpose(out, (1, 0, 2))
    return ln(out, params["LNout_g"], params["LNout_b"])


# ----------------------------------------------------------------------------
# Deterministic parameter init (shapes follow the PyTorch module __init__).
# ----------------------------------------------------------------------------
def init_params(key, input_size, hidden_size):
    assert input_size % 3 == 0, "input_size must be divisible by len(cnn_kernels)=3"
    assert hidden_size % 2 == 0, "hidden_size must be even (bidirectional)"
    D = input_size
    O = D // 3
    H = hidden_size // 2        # bidirectional -> per-direction hidden
    keys = jax.random.split(key, 16)
    u = lambda k, shape, s=0.3: jax.random.uniform(k, shape, jnp.float32, -s, s)
    params = {
        "conv3_w": u(keys[0], (O, D, 3)), "conv3_b": u(keys[1], (O,)),
        "conv5_w": u(keys[2], (O, D, 5)), "conv5_b": u(keys[3], (O,)),
        "conv7_w": u(keys[4], (O, D, 7)), "conv7_b": u(keys[5], (O,)),
        "Wxrz_w": u(keys[6], (2 * H, D)), "Wxrz_b": u(keys[7], (2 * H,)),
        "Whrz_w": u(keys[8], (2 * H, H)), "Whrz_b": u(keys[9], (2 * H,)),
        "Wxn_w": u(keys[10], (H, D)), "Wxn_b": u(keys[11], (H,)),
        "Whn_w": u(keys[12], (H, H)), "Whn_b": u(keys[13], (H,)),
        # LayerNorm params (PyTorch default init: weight=1, bias=0)
        "LNx1_g": jnp.ones((2 * H,), jnp.float32), "LNx1_b": jnp.zeros((2 * H,), jnp.float32),
        "LNh1_g": jnp.ones((2 * H,), jnp.float32), "LNh1_b": jnp.zeros((2 * H,), jnp.float32),
        "LNx2_g": jnp.ones((H,), jnp.float32), "LNx2_b": jnp.zeros((H,), jnp.float32),
        "LNh2_g": jnp.ones((H,), jnp.float32), "LNh2_b": jnp.zeros((H,), jnp.float32),
        "LNout_g": jnp.ones((hidden_size,), jnp.float32),
        "LNout_b": jnp.zeros((hidden_size,), jnp.float32),
    }
    return params


if __name__ == "__main__":
    B, T = 2, 8
    input_size = 12          # divisible by len(cnn_kernels)=3, as the module implies
    hidden_size = 32         # bidirectional -> 16 per direction

    key = jax.random.PRNGKey(0)
    k_x, k_p = jax.random.split(key)
    x = jax.random.normal(k_x, (B, T, input_size), jnp.float32)
    params = init_params(k_p, input_size, hidden_size)

    packed = pack_params(params)            # one-time weight packing (hoisted)
    fwd = jax.jit(cnn_bigru_forward)
    out = jax.block_until_ready(fwd(x, packed))

    ref = reference_forward(x, params)
    assert out.shape == (B, T, hidden_size), out.shape
    err = float(jnp.max(jnp.abs(out - ref)))
    # bf16 MXU operands in the conv / x-projection stages -> relaxed tolerance.
    assert jnp.allclose(out, ref, rtol=5e-2, atol=5e-2), f"max abs err {err}"

    print("KERNEL_OK")
</pallas_src>

<mosaic_0001>
module attributes {stable_mosaic.version = 11 : i64} {
  func.func @cnn_bigru_kernel(%arg0: memref<16x84xbf16, #tpu.memory_space<vmem>>, %arg1: memref<84x12xbf16, #tpu.memory_space<vmem>>, %arg2: memref<1x12xf32, #tpu.memory_space<vmem>>, %arg3: memref<12x48xbf16, #tpu.memory_space<vmem>>, %arg4: memref<1x48xf32, #tpu.memory_space<vmem>>, %arg5: memref<1x32xf32, #tpu.memory_space<vmem>>, %arg6: memref<1x32xf32, #tpu.memory_space<vmem>>, %arg7: memref<1x16xf32, #tpu.memory_space<vmem>>, %arg8: memref<1x16xf32, #tpu.memory_space<vmem>>, %arg9: memref<16x48xf32, #tpu.memory_space<vmem>>, %arg10: memref<1x48xf32, #tpu.memory_space<vmem>>, %arg11: memref<1x32xf32, #tpu.memory_space<vmem>>, %arg12: memref<1x32xf32, #tpu.memory_space<vmem>>, %arg13: memref<1x16xf32, #tpu.memory_space<vmem>>, %arg14: memref<1x16xf32, #tpu.memory_space<vmem>>, %arg15: memref<1x32xf32, #tpu.memory_space<vmem>>, %arg16: memref<1x32xf32, #tpu.memory_space<vmem>>, %arg17: memref<32x16xf32, #tpu.memory_space<vmem>>, %arg18: memref<16x32xf32, #tpu.memory_space<vmem>>, %arg19: memref<16x32xf32, #tpu.memory_space<vmem>>, %arg20: memref<16x32xf32, #tpu.memory_space<vmem>>, %arg21: memref<32x48xf32, #tpu.memory_space<vmem>>, %arg22: memref<32x16xf32, #tpu.memory_space<vmem>>) attributes {dimension_semantics = [], scalar_prefetch = 0 : i64, scratch_operands = 2 : i64, tpu.core_type = #tpu.core_type<tc>} {
    %c0 = arith.constant 0 : index
    %c0_0 = arith.constant 0 : index
    %0 = vector.load %arg0[%c0, %c0_0] : memref<16x84xbf16, #tpu.memory_space<vmem>>, vector<16x84xbf16>
    %c0_1 = arith.constant 0 : index
    %c0_2 = arith.constant 0 : index
    %1 = vector.load %arg1[%c0_1, %c0_2] : memref<84x12xbf16, #tpu.memory_space<vmem>>, vector<84x12xbf16>
    %cst = arith.constant dense<0.000000e+00> : vector<16x12xf32>
    %2 = tpu.matmul %0, %1, %cst {dimension_numbers = #tpu.dot_dimension_numbers<[1], [0], [0], [1], [0, 0, 1, 1], [], []>} : vector<16x84xbf16>, vector<84x12xbf16>, vector<16x12xf32> -> vector<16x12xf32>
    %c0_3 = arith.constant 0 : index
    %c0_4 = arith.constant 0 : index
    %3 = vector.load %arg2[%c0_3, %c0_4] : memref<1x12xf32, #tpu.memory_space<vmem>>, vector<1x12xf32>
    %4 = vector.broadcast %3 : vector<1x12xf32> to vector<16x12xf32>
    %5 = arith.addf %2, %4 : vector<16x12xf32>
    %6 = arith.truncf %5 : vector<16x12xf32> to vector<16x12xbf16>
    %c0_5 = arith.constant 0 : index
    %c0_6 = arith.constant 0 : index
    %7 = vector.load %arg3[%c0_5, %c0_6] : memref<12x48xbf16, #tpu.memory_space<vmem>>, vector<12x48xbf16>
    %cst_7 = arith.constant dense<0.000000e+00> : vector<16x48xf32>
    %8 = tpu.matmul %6, %7, %cst_7 {dimension_numbers = #tpu.dot_dimension_numbers<[1], [0], [0], [1], [0, 0, 1, 1], [], []>} : vector<16x12xbf16>, vector<12x48xbf16>, vector<16x48xf32> -> vector<16x48xf32>
    %c0_8 = arith.constant 0 : index
    %c0_9 = arith.constant 0 : index
    %9 = vector.load %arg4[%c0_8, %c0_9] : memref<1x48xf32, #tpu.memory_space<vmem>>, vector<1x48xf32>
    %10 = vector.broadcast %9 : vector<1x48xf32> to vector<16x48xf32>
    %11 = arith.addf %8, %10 : vector<16x48xf32>
    %12 = vector.extract_strided_slice %11 {offsets = [0, 0], sizes = [16, 32], strides = [1, 1]} : vector<16x48xf32> to vector<16x32xf32>
    %c0_10 = arith.constant 0 : index
    %c0_11 = arith.constant 0 : index
    %13 = vector.load %arg5[%c0_10, %c0_11] : memref<1x32xf32, #tpu.memory_space<vmem>>, vector<1x32xf32>
    %c0_12 = arith.constant 0 : index
    %c0_13 = arith.constant 0 : index
    %14 = vector.load %arg6[%c0_12, %c0_13] : memref<1x32xf32, #tpu.memory_space<vmem>>, vector<1x32xf32>
    %cst_14 = arith.constant dense<0.000000e+00> : vector<16xf32>
    %15 = vector.multi_reduction <add>, %12, %cst_14 [1] : vector<16x32xf32> to vector<16xf32>
    %16 = vector.shape_cast %15 : vector<16xf32> to vector<16x1xf32>
    %cst_15 = arith.constant 3.200000e+01 : f32
    %17 = vector.broadcast %cst_15 : f32 to vector<16x1xf32>
    %18 = arith.divf %16, %17 : vector<16x1xf32>
    %19 = vector.broadcast %18 : vector<16x1xf32> to vector<16x32xf32>
    %20 = arith.subf %12, %19 : vector<16x32xf32>
    %21 = arith.mulf %20, %20 : vector<16x32xf32>
    %cst_16 = arith.constant dense<0.000000e+00> : vector<16xf32>
    %22 = vector.multi_reduction <add>, %21, %cst_16 [1] : vector<16x32xf32> to vector<16xf32>
    %23 = vector.shape_cast %22 : vector<16xf32> to vector<16x1xf32>
    %cst_17 = arith.constant 3.200000e+01 : f32
    %24 = vector.broadcast %cst_17 : f32 to vector<16x1xf32>
    %25 = arith.divf %23, %24 : vector<16x1xf32>
    %26 = vector.broadcast %18 : vector<16x1xf32> to vector<16x32xf32>
    %27 = arith.subf %12, %26 : vector<16x32xf32>
    %cst_18 = arith.constant 9.99999974E-6 : f32
    %28 = vector.broadcast %cst_18 : f32 to vector<16x1xf32>
    %29 = arith.addf %25, %28 : vector<16x1xf32>
    %30 = math.rsqrt %29 : vector<16x1xf32>
    %31 = vector.broadcast %30 : vector<16x1xf32> to vector<16x32xf32>
    %32 = arith.mulf %27, %31 : vector<16x32xf32>
    %33 = vector.broadcast %13 : vector<1x32xf32> to vector<16x32xf32>
    %34 = arith.mulf %32, %33 : vector<16x32xf32>
    %35 = vector.broadcast %14 : vector<1x32xf32> to vector<16x32xf32>
    %36 = arith.addf %34, %35 : vector<16x32xf32>
    %37 = vector.extract_strided_slice %11 {offsets = [0, 32], sizes = [16, 16], strides = [1, 1]} : vector<16x48xf32> to vector<16x16xf32>
    %c0_19 = arith.constant 0 : index
    %c0_20 = arith.constant 0 : index
    %38 = vector.load %arg7[%c0_19, %c0_20] : memref<1x16xf32, #tpu.memory_space<vmem>>, vector<1x16xf32>
    %c0_21 = arith.constant 0 : index
    %c0_22 = arith.constant 0 : index
    %39 = vector.load %arg8[%c0_21, %c0_22] : memref<1x16xf32, #tpu.memory_space<vmem>>, vector<1x16xf32>
    %cst_23 = arith.constant dense<0.000000e+00> : vector<16xf32>
    %40 = vector.multi_reduction <add>, %37, %cst_23 [1] : vector<16x16xf32> to vector<16xf32>
    %41 = vector.shape_cast %40 : vector<16xf32> to vector<16x1xf32>
    %cst_24 = arith.constant 1.600000e+01 : f32
    %42 = vector.broadcast %cst_24 : f32 to vector<16x1xf32>
    %43 = arith.divf %41, %42 : vector<16x1xf32>
    %44 = vector.broadcast %43 : vector<16x1xf32> to vector<16x16xf32>
    %45 = arith.subf %37, %44 : vector<16x16xf32>
    %46 = arith.mulf %45, %45 : vector<16x16xf32>
    %cst_25 = arith.constant dense<0.000000e+00> : vector<16xf32>
    %47 = vector.multi_reduction <add>, %46, %cst_25 [1] : vector<16x16xf32> to vector<16xf32>
    %48 = vector.shape_cast %47 : vector<16xf32> to vector<16x1xf32>
    %cst_26 = arith.constant 1.600000e+01 : f32
    %49 = vector.broadcast %cst_26 : f32 to vector<16x1xf32>
    %50 = arith.divf %48, %49 : vector<16x1xf32>
    %51 = vector.broadcast %43 : vector<16x1xf32> to vector<16x16xf32>
    %52 = arith.subf %37, %51 : vector<16x16xf32>
    %cst_27 = arith.constant 9.99999974E-6 : f32
    %53 = vector.broadcast %cst_27 : f32 to vector<16x1xf32>
    %54 = arith.addf %50, %53 : vector<16x1xf32>
    %55 = math.rsqrt %54 : vector<16x1xf32>
    %56 = vector.broadcast %55 : vector<16x1xf32> to vector<16x16xf32>
    %57 = arith.mulf %52, %56 : vector<16x16xf32>
    %58 = vector.broadcast %38 : vector<1x16xf32> to vector<16x16xf32>
    %59 = arith.mulf %57, %58 : vector<16x16xf32>
    %60 = vector.broadcast %39 : vector<1x16xf32> to vector<16x16xf32>
    %61 = arith.addf %59, %60 : vector<16x16xf32>
    %62 = tpu.concatenate %36, %61 in 1 : vector<16x32xf32>, vector<16x16xf32> -> vector<16x48xf32>
    %c0_28 = arith.constant 0 : index
    %c0_29 = arith.constant 0 : index
    %63 = vector.load %arg17[%c0_28, %c0_29] : memref<32x16xf32, #tpu.memory_space<vmem>>, vector<32x16xf32>
    %cst_30 = arith.constant dense<0.000000e+00> : vector<32x48xf32>
    %64 = tpu.matmul %63, %62, %cst_30 {dimension_numbers = #tpu.dot_dimension_numbers<[1], [0], [0], [1], [0, 0, 1, 1], [], []>} : vector<32x16xf32>, vector<16x48xf32>, vector<32x48xf32> -> vector<32x48xf32>
    %c0_31 = arith.constant 0 : index
    %c0_32 = arith.constant 0 : index
    %65 = vector.load %arg21[%c0_31, %c0_32] : memref<32x48xf32, #tpu.memory_space<vmem>>, vector<32x48xf32>
    tpu.vector_store %arg21[%c0_31, %c0_32], %64 {strides = array<i32>} : memref<32x48xf32, #tpu.memory_space<vmem>>, vector<32x48xf32>,
    %c0_33 = arith.constant 0 : index
    %c0_34 = arith.constant 0 : index
    %66 = vector.load %arg9[%c0_33, %c0_34] : memref<16x48xf32, #tpu.memory_space<vmem>>, vector<16x48xf32>
    %c0_35 = arith.constant 0 : index
    %c0_36 = arith.constant 0 : index
    %67 = vector.load %arg10[%c0_35, %c0_36] : memref<1x48xf32, #tpu.memory_space<vmem>>, vector<1x48xf32>
    %c0_37 = arith.constant 0 : index
    %c0_38 = arith.constant 0 : index
    %68 = vector.load %arg11[%c0_37, %c0_38] : memref<1x32xf32, #tpu.memory_space<vmem>>, vector<1x32xf32>
    %c0_39 = arith.constant 0 : index
    %c0_40 = arith.constant 0 : index
    %69 = vector.load %arg12[%c0_39, %c0_40] : memref<1x32xf32, #tpu.memory_space<vmem>>, vector<1x32xf32>
    %c0_41 = arith.constant 0 : index
    %c0_42 = arith.constant 0 : index
    %70 = vector.load %arg13[%c0_41, %c0_42] : memref<1x16xf32, #tpu.memory_space<vmem>>, vector<1x16xf32>
    %c0_43 = arith.constant 0 : index
    %c0_44 = arith.constant 0 : index
    %71 = vector.load %arg14[%c0_43, %c0_44] : memref<1x16xf32, #tpu.memory_space<vmem>>, vector<1x16xf32>
    %cst_45 = arith.constant 0.000000e+00 : f32
    %72 = vector.broadcast %cst_45 : f32 to vector<4x16xf32>
    %c0_i32 = arith.constant 0 : i32
    %c4_i32 = arith.constant 4 : i32
    %73 = arith.muli %c0_i32, %c4_i32 : i32
    %74 = arith.index_cast %73 : i32 to index
    %c0_46 = arith.constant 0 : index
    %75 = vector.load %arg21[%74, %c0_46] : memref<32x48xf32, #tpu.memory_space<vmem>>, vector<4x48xf32>
    %cst_47 = arith.constant dense<0.000000e+00> : vector<4x48xf32>
    %76 = tpu.matmul %72, %66, %cst_47 {dimension_numbers = #tpu.dot_dimension_numbers<[1], [0], [0], [1], [0, 0, 1, 1], [], []>} : vector<4x16xf32>, vector<16x48xf32>, vector<4x48xf32> -> vector<4x48xf32>
    %77 = vector.broadcast %67 : vector<1x48xf32> to vector<4x48xf32>
    %78 = arith.addf %76, %77 : vector<4x48xf32>
    %79 = vector.extract_strided_slice %75 {offsets = [0, 0], sizes = [4, 32], strides = [1, 1]} : vector<4x48xf32> to vector<4x32xf32>
    %80 = vector.extract_strided_slice %78 {offsets = [0, 0], sizes = [4, 32], strides = [1, 1]} : vector<4x48xf32> to vector<4x32xf32>
    %cst_48 = arith.constant dense<0.000000e+00> : vector<4xf32>
    %81 = vector.multi_reduction <add>, %80, %cst_48 [1] : vector<4x32xf32> to vector<4xf32>
    %82 = vector.shape_cast %81 : vector<4xf32> to vector<4x1xf32>
    %cst_49 = arith.constant 3.200000e+01 : f32
    %83 = vector.broadcast %cst_49 : f32 to vector<4x1xf32>
    %84 = arith.divf %82, %83 : vector<4x1xf32>
    %85 = vector.broadcast %84 : vector<4x1xf32> to vector<4x32xf32>
    %86 = arith.subf %80, %85 : vector<4x32xf32>
    %87 = arith.mulf %86, %86 : vector<4x32xf32>
    %cst_50 = arith.constant dense<0.000000e+00> : vector<4xf32>
    %88 = vector.multi_reduction <add>, %87, %cst_50 [1] : vector<4x32xf32> to vector<4xf32>
    %89 = vector.shape_cast %88 : vector<4xf32> to vector<4x1xf32>
    %cst_51 = arith.constant 3.200000e+01 : f32
    %90 = vector.broadcast %cst_51 : f32 to vector<4x1xf32>
    %91 = arith.divf %89, %90 : vector<4x1xf32>
    %92 = vector.broadcast %84 : vector<4x1xf32> to vector<4x32xf32>
    %93 = arith.subf %80, %92 : vector<4x32xf32>
    %cst_52 = arith.constant 9.99999974E-6 : f32
    %94 = vector.broadcast %cst_52 : f32 to vector<4x1xf32>
    %95 = arith.addf %91, %94 : vector<4x1xf32>
    %96 = math.rsqrt %95 : vector<4x1xf32>
    %97 = vector.broadcast %96 : vector<4x1xf32> to vector<4x32xf32>
    %98 = arith.mulf %93, %97 : vector<4x32xf32>
    %99 = vector.broadcast %68 : vector<1x32xf32> to vector<4x32xf32>
    %100 = arith.mulf %98, %99 : vector<4x32xf32>
    %101 = vector.broadcast %69 : vector<1x32xf32> to vector<4x32xf32>
    %102 = arith.addf %100, %101 : vector<4x32xf32>
    %103 = arith.addf %79, %102 : vector<4x32xf32>
    %104 = arith.negf %103 : vector<4x32xf32>
    %105 = math.exp %104 : vector<4x32xf32>
    %cst_53 = arith.constant 1.000000e+00 : f32
    %106 = vector.broadcast %cst_53 : f32 to vector<4x32xf32>
    %107 = arith.addf %106, %105 : vector<4x32xf32>
    %108 = arith.divf %106, %107 : vector<4x32xf32>
    %109 = vector.extract_strided_slice %108 {offsets = [0, 0], sizes = [4, 16], strides = [1, 1]} : vector<4x32xf32> to vector<4x16xf32>
    %110 = vector.extract_strided_slice %108 {offsets = [0, 16], sizes = [4, 16], strides = [1, 1]} : vector<4x32xf32> to vector<4x16xf32>
    %111 = vector.extract_strided_slice %75 {offsets = [0, 32], sizes = [4, 16], strides = [1, 1]} : vector<4x48xf32> to vector<4x16xf32>
    %112 = vector.extract_strided_slice %78 {offsets = [0, 32], sizes = [4, 16], strides = [1, 1]} : vector<4x48xf32> to vector<4x16xf32>
    %cst_54 = arith.constant dense<0.000000e+00> : vector<4xf32>
    %113 = vector.multi_reduction <add>, %112, %cst_54 [1] : vector<4x16xf32> to vector<4xf32>
    %114 = vector.shape_cast %113 : vector<4xf32> to vector<4x1xf32>
    %cst_55 = arith.constant 1.600000e+01 : f32
    %115 = vector.broadcast %cst_55 : f32 to vector<4x1xf32>
    %116 = arith.divf %114, %115 : vector<4x1xf32>
    %117 = vector.broadcast %116 : vector<4x1xf32> to vector<4x16xf32>
    %118 = arith.subf %112, %117 : vector<4x16xf32>
    %119 = arith.mulf %118, %118 : vector<4x16xf32>
    %cst_56 = arith.constant dense<0.000000e+00> : vector<4xf32>
    %120 = vector.multi_reduction <add>, %119, %cst_56 [1] : vector<4x16xf32> to vector<4xf32>
    %121 = vector.shape_cast %120 : vector<4xf32> to vector<4x1xf32>
    %cst_57 = arith.constant 1.600000e+01 : f32
    %122 = vector.broadcast %cst_57 : f32 to vector<4x1xf32>
    %123 = arith.divf %121, %122 : vector<4x1xf32>
    %124 = vector.broadcast %116 : vector<4x1xf32> to vector<4x16xf32>
    %125 = arith.subf %112, %124 : vector<4x16xf32>
    %cst_58 = arith.constant 9.99999974E-6 : f32
    %126 = vector.broadcast %cst_58 : f32 to vector<4x1xf32>
    %127 = arith.addf %123, %126 : vector<4x1xf32>
    %128 = math.rsqrt %127 : vector<4x1xf32>
    %129 = vector.broadcast %128 : vector<4x1xf32> to vector<4x16xf32>
    %130 = arith.mulf %125, %129 : vector<4x16xf32>
    %131 = vector.broadcast %70 : vector<1x16xf32> to vector<4x16xf32>
    %132 = arith.mulf %130, %131 : vector<4x16xf32>
    %133 = vector.broadcast %71 : vector<1x16xf32> to vector<4x16xf32>
    %134 = arith.addf %132, %133 : vector<4x16xf32>
    %135 = arith.mulf %109, %134 : vector<4x16xf32>
    %136 = arith.addf %111, %135 : vector<4x16xf32>
    %137 = math.tanh %136 : vector<4x16xf32>
    %cst_59 = arith.constant 1.000000e+00 : f32
    %138 = vector.broadcast %cst_59 : f32 to vector<4x16xf32>
    %139 = arith.subf %138, %110 : vector<4x16xf32>
    %140 = arith.mulf %139, %137 : vector<4x16xf32>
    %141 = arith.mulf %110, %72 : vector<4x16xf32>
    %142 = arith.addf %140, %141 : vector<4x16xf32>
    %c4_i32_60 = arith.constant 4 : i32
    %143 = arith.muli %c0_i32, %c4_i32_60 : i32
    %144 = arith.index_cast %143 : i32 to index
    %c0_61 = arith.constant 0 : index
    %145 = vector.load %arg22[%144, %c0_61] : memref<32x16xf32, #tpu.memory_space<vmem>>, vector<4x16xf32>
    tpu.vector_store %arg22[%144, %c0_61], %142 {strides = array<i32>} : memref<32x16xf32, #tpu.memory_space<vmem>>, vector<4x16xf32>,
    %c1_i32 = arith.constant 1 : i32
    %c4_i32_62 = arith.constant 4 : i32
    %146 = arith.muli %c1_i32, %c4_i32_62 : i32
    %147 = arith.index_cast %146 : i32 to index
    %c0_63 = arith.constant 0 : index
    %148 = vector.load %arg21[%147, %c0_63] : memref<32x48xf32, #tpu.memory_space<vmem>>, vector<4x48xf32>
    %cst_64 = arith.constant dense<0.000000e+00> : vector<4x48xf32>
    %149 = tpu.matmul %142, %66, %cst_64 {dimension_numbers = #tpu.dot_dimension_numbers<[1], [0], [0], [1], [0, 0, 1, 1], [], []>} : vector<4x16xf32>, vector<16x48xf32>, vector<4x48xf32> -> vector<4x48xf32>
    %150 = vector.broadcast %67 : vector<1x48xf32> to vector<4x48xf32>
    %151 = arith.addf %149, %150 : vector<4x48xf32>
    %152 = vector.extract_strided_slice %148 {offsets = [0, 0], sizes = [4, 32], strides = [1, 1]} : vector<4x48xf32> to vector<4x32xf32>
    %153 = vector.extract_strided_slice %151 {offsets = [0, 0], sizes = [4, 32], strides = [1, 1]} : vector<4x48xf32> to vector<4x32xf32>
    %cst_65 = arith.constant dense<0.000000e+00> : vector<4xf32>
    %154 = vector.multi_reduction <add>, %153, %cst_65 [1] : vector<4x32xf32> to vector<4xf32>
    %155 = vector.shape_cast %154 : vector<4xf32> to vector<4x1xf32>
    %cst_66 = arith.constant 3.200000e+01 : f32
    %156 = vector.broadcast %cst_66 : f32 to vector<4x1xf32>
    %157 = arith.divf %155, %156 : vector<4x1xf32>
    %158 = vector.broadcast %157 : vector<4x1xf32> to vector<4x32xf32>
    %159 = arith.subf %153, %158 : vector<4x32xf32>
    %160 = arith.mulf %159, %159 : vector<4x32xf32>
    %cst_67 = arith.constant dense<0.000000e+00> : vector<4xf32>
    %161 = vector.multi_reduction <add>, %160, %cst_67 [1] : vector<4x32xf32> to vector<4xf32>
    %162 = vector.shape_cast %161 : vector<4xf32> to vector<4x1xf32>
    %cst_68 = arith.constant 3.200000e+01 : f32
    %163 = vector.broadcast %cst_68 : f32 to vector<4x1xf32>
    %164 = arith.divf %162, %163 : vector<4x1xf32>
    %165 = vector.broadcast %157 : vector<4x1xf32> to vector<4x32xf32>
    %166 = arith.subf %153, %165 : vector<4x32xf32>
    %cst_69 = arith.constant 9.99999974E-6 : f32
    %167 = vector.broadcast %cst_69 : f32 to vector<4x1xf32>
    %168 = arith.addf %164, %167 : vector<4x1xf32>
    %169 = math.rsqrt %168 : vector<4x1xf32>
    %170 = vector.broadcast %169 : vector<4x1xf32> to vector<4x32xf32>
    %171 = arith.mulf %166, %170 : vector<4x32xf32>
    %172 = vector.broadcast %68 : vector<1x32xf32> to vector<4x32xf32>
    %173 = arith.mulf %171, %172 : vector<4x32xf32>
    %174 = vector.broadcast %69 : vector<1x32xf32> to vector<4x32xf32>
    %175 = arith.addf %173, %174 : vector<4x32xf32>
    %176 = arith.addf %152, %175 : vector<4x32xf32>
    %177 = arith.negf %176 : vector<4x32xf32>
    %178 = math.exp %177 : vector<4x32xf32>
    %cst_70 = arith.constant 1.000000e+00 : f32
    %179 = vector.broadcast %cst_70 : f32 to vector<4x32xf32>
    %180 = arith.addf %179, %178 : vector<4x32xf32>
    %181 = arith.divf %179, %180 : vector<4x32xf32>
    %182 = vector.extract_strided_slice %181 {offsets = [0, 0], sizes = [4, 16], strides = [1, 1]} : vector<4x32xf32> to vector<4x16xf32>
    %183 = vector.extract_strided_slice %181 {offsets = [0, 16], sizes = [4, 16], strides = [1, 1]} : vector<4x32xf32> to vector<4x16xf32>
    %184 = vector.extract_strided_slice %148 {offsets = [0, 32], sizes = [4, 16], strides = [1, 1]} : vector<4x48xf32> to vector<4x16xf32>
    %185 = vector.extract_strided_slice %151 {offsets = [0, 32], sizes = [4, 16], strides = [1, 1]} : vector<4x48xf32> to vector<4x16xf32>
    %cst_71 = arith.constant dense<0.000000e+00> : vector<4xf32>
    %186 = vector.multi_reduction <add>, %185, %cst_71 [1] : vector<4x16xf32> to vector<4xf32>
    %187 = vector.shape_cast %186 : vector<4xf32> to vector<4x1xf32>
    %cst_72 = arith.constant 1.600000e+01 : f32
    %188 = vector.broadcast %cst_72 : f32 to vector<4x1xf32>
    %189 = arith.divf %187, %188 : vector<4x1xf32>
    %190 = vector.broadcast %189 : vector<4x1xf32> to vector<4x16xf32>
    %191 = arith.subf %185, %190 : vector<4x16xf32>
    %192 = arith.mulf %191, %191 : vector<4x16xf32>
    %cst_73 = arith.constant dense<0.000000e+00> : vector<4xf32>
    %193 = vector.multi_reduction <add>, %192, %cst_73 [1] : vector<4x16xf32> to vector<4xf32>
    %194 = vector.shape_cast %193 : vector<4xf32> to vector<4x1xf32>
    %cst_74 = arith.constant 1.600000e+01 : f32
    %195 = vector.broadcast %cst_74 : f32 to vector<4x1xf32>
    %196 = arith.divf %194, %195 : vector<4x1xf32>
    %197 = vector.broadcast %189 : vector<4x1xf32> to vector<4x16xf32>
    %198 = arith.subf %185, %197 : vector<4x16xf32>
    %cst_75 = arith.constant 9.99999974E-6 : f32
    %199 = vector.broadcast %cst_75 : f32 to vector<4x1xf32>
    %200 = arith.addf %196, %199 : vector<4x1xf32>
    %201 = math.rsqrt %200 : vector<4x1xf32>
    %202 = vector.broadcast %201 : vector<4x1xf32> to vector<4x16xf32>
    %203 = arith.mulf %198, %202 : vector<4x16xf32>
    %204 = vector.broadcast %70 : vector<1x16xf32> to vector<4x16xf32>
    %205 = arith.mulf %203, %204 : vector<4x16xf32>
    %206 = vector.broadcast %71 : vector<1x16xf32> to vector<4x16xf32>
    %207 = arith.addf %205, %206 : vector<4x16xf32>
    %208 = arith.mulf %182, %207 : vector<4x16xf32>
    %209 = arith.addf %184, %208 : vector<4x16xf32>
    %210 = math.tanh %209 : vector<4x16xf32>
    %cst_76 = arith.constant 1.000000e+00 : f32
    %211 = vector.broadcast %cst_76 : f32 to vector<4x16xf32>
    %212 = arith.subf %211, %183 : vector<4x16xf32>
    %213 = arith.mulf %212, %210 : vector<4x16xf32>
    %214 = arith.mulf %183, %142 : vector<4x16xf32>
    %215 = arith.addf %213, %214 : vector<4x16xf32>
    %c4_i32_77 = arith.constant 4 : i32
    %216 = arith.muli %c1_i32, %c4_i32_77 : i32
    %217 = arith.index_cast %216 : i32 to index
    %c0_78 = arith.constant 0 : index
    %218 = vector.load %arg22[%217, %c0_78] : memref<32x16xf32, #tpu.memory_space<vmem>>, vector<4x16xf32>
    tpu.vector_store %arg22[%217, %c0_78], %215 {strides = array<i32>} : memref<32x16xf32, #tpu.memory_space<vmem>>, vector<4x16xf32>,
    %c2_i32 = arith.constant 2 : i32
    %c4_i32_79 = arith.constant 4 : i32
    %219 = arith.muli %c2_i32, %c4_i32_79 : i32
    %220 = arith.index_cast %219 : i32 to index
    %c0_80 = arith.constant 0 : index
    %221 = vector.load %arg21[%220, %c0_80] : memref<32x48xf32, #tpu.memory_space<vmem>>, vector<4x48xf32>
    %cst_81 = arith.constant dense<0.000000e+00> : vector<4x48xf32>
    %222 = tpu.matmul %215, %66, %cst_81 {dimension_numbers = #tpu.dot_dimension_numbers<[1], [0], [0], [1], [0, 0, 1, 1], [], []>} : vector<4x16xf32>, vector<16x48xf32>, vector<4x48xf32> -> vector<4x48xf32>
    %223 = vector.broadcast %67 : vector<1x48xf32> to vector<4x48xf32>
    %224 = arith.addf %222, %223 : vector<4x48xf32>
    %225 = vector.extract_strided_slice %221 {offsets = [0, 0], sizes = [4, 32], strides = [1, 1]} : vector<4x48xf32> to vector<4x32xf32>
    %226 = vector.extract_strided_slice %224 {offsets = [0, 0], sizes = [4, 32], strides = [1, 1]} : vector<4x48xf32> to vector<4x32xf32>
    %cst_82 = arith.constant dense<0.000000e+00> : vector<4xf32>
    %227 = vector.multi_reduction <add>, %226, %cst_82 [1] : vector<4x32xf32> to vector<4xf32>
    %228 = vector.shape_cast %227 : vector<4xf32> to vector<4x1xf32>
    %cst_83 = arith.constant 3.200000e+01 : f32
    %229 = vector.broadcast %cst_83 : f32 to vector<4x1xf32>
    %230 = arith.divf %228, %229 : vector<4x1xf32>
    %231 = vector.broadcast %230 : vector<4x1xf32> to vector<4x32xf32>
    %232 = arith.subf %226, %231 : vector<4x32xf32>
    %233 = arith.mulf %232, %232 : vector<4x32xf32>
    %cst_84 = arith.constant dense<0.000000e+00> : vector<4xf32>
    %234 = vector.multi_reduction <add>, %233, %cst_84 [1] : vector<4x32xf32> to vector<4xf32>
    %235 = vector.shape_cast %234 : vector<4xf32> to vector<4x1xf32>
    %cst_85 = arith.constant 3.200000e+01 : f32
    %236 = vector.broadcast %cst_85 : f32 to vector<4x1xf32>
    %237 = arith.divf %235, %236 : vector<4x1xf32>
    %238 = vector.broadcast %230 : vector<4x1xf32> to vector<4x32xf32>
    %239 = arith.subf %226, %238 : vector<4x32xf32>
    %cst_86 = arith.constant 9.99999974E-6 : f32
    %240 = vector.broadcast %cst_86 : f32 to vector<4x1xf32>
    %241 = arith.addf %237, %240 : vector<4x1xf32>
    %242 = math.rsqrt %241 : vector<4x1xf32>
    %243 = vector.broadcast %242 : vector<4x1xf32> to vector<4x32xf32>
    %244 = arith.mulf %239, %243 : vector<4x32xf32>
    %245 = vector.broadcast %68 : vector<1x32xf32> to vector<4x32xf32>
    %246 = arith.mulf %244, %245 : vector<4x32xf32>
    %247 = vector.broadcast %69 : vector<1x32xf32> to vector<4x32xf32>
    %248 = arith.addf %246, %247 : vector<4x32xf32>
    %249 = arith.addf %225, %248 : vector<4x32xf32>
    %250 = arith.negf %249 : vector<4x32xf32>
    %251 = math.exp %250 : vector<4x32xf32>
    %cst_87 = arith.constant 1.000000e+00 : f32
    %252 = vector.broadcast %cst_87 : f32 to vector<4x32xf32>
    %253 = arith.addf %252, %251 : vector<4x32xf32>
    %254 = arith.divf %252, %253 : vector<4x32xf32>
    %255 = vector.extract_strided_slice %254 {offsets = [0, 0], sizes = [4, 16], strides = [1, 1]} : vector<4x32xf32> to vector<4x16xf32>
    %256 = vector.extract_strided_slice %254 {offsets = [0, 16], sizes = [4, 16], strides = [1, 1]} : vector<4x32xf32> to vector<4x16xf32>
    %257 = vector.extract_strided_slice %221 {offsets = [0, 32], sizes = [4, 16], strides = [1, 1]} : vector<4x48xf32> to vector<4x16xf32>
    %258 = vector.extract_strided_slice %224 {offsets = [0, 32], sizes = [4, 16], strides = [1, 1]} : vector<4x48xf32> to vector<4x16xf32>
    %cst_88 = arith.constant dense<0.000000e+00> : vector<4xf32>
    %259 = vector.multi_reduction <add>, %258, %cst_88 [1] : vector<4x16xf32> to vector<4xf32>
    %260 = vector.shape_cast %259 : vector<4xf32> to vector<4x1xf32>
    %cst_89 = arith.constant 1.600000e+01 : f32
    %261 = vector.broadcast %cst_89 : f32 to vector<4x1xf32>
    %262 = arith.divf %260, %261 : vector<4x1xf32>
    %263 = vector.broadcast %262 : vector<4x1xf32> to vector<4x16xf32>
    %264 = arith.subf %258, %263 : vector<4x16xf32>
    %265 = arith.mulf %264, %264 : vector<4x16xf32>
    %cst_90 = arith.constant dense<0.000000e+00> : vector<4xf32>
    %266 = vector.multi_reduction <add>, %265, %cst_90 [1] : vector<4x16xf32> to vector<4xf32>
    %267 = vector.shape_cast %266 : vector<4xf32> to vector<4x1xf32>
    %cst_91 = arith.constant 1.600000e+01 : f32
    %268 = vector.broadcast %cst_91 : f32 to vector<4x1xf32>
    %269 = arith.divf %267, %268 : vector<4x1xf32>
    %270 = vector.broadcast %262 : vector<4x1xf32> to vector<4x16xf32>
    %271 = arith.subf %258, %270 : vector<4x16xf32>
    %cst_92 = arith.constant 9.99999974E-6 : f32
    %272 = vector.broadcast %cst_92 : f32 to vector<4x1xf32>
    %273 = arith.addf %269, %272 : vector<4x1xf32>
    %274 = math.rsqrt %273 : vector<4x1xf32>
    %275 = vector.broadcast %274 : vector<4x1xf32> to vector<4x16xf32>
    %276 = arith.mulf %271, %275 : vector<4x16xf32>
    %277 = vector.broadcast %70 : vector<1x16xf32> to vector<4x16xf32>
    %278 = arith.mulf %276, %277 : vector<4x16xf32>
    %279 = vector.broadcast %71 : vector<1x16xf32> to vector<4x16xf32>
    %280 = arith.addf %278, %279 : vector<4x16xf32>
    %281 = arith.mulf %255, %280 : vector<4x16xf32>
    %282 = arith.addf %257, %281 : vector<4x16xf32>
    %283 = math.tanh %282 : vector<4x16xf32>
    %cst_93 = arith.constant 1.000000e+00 : f32
    %284 = vector.broadcast %cst_93 : f32 to vector<4x16xf32>
    %285 = arith.subf %284, %256 : vector<4x16xf32>
    %286 = arith.mulf %285, %283 : vector<4x16xf32>
    %287 = arith.mulf %256, %215 : vector<4x16xf32>
    %288 = arith.addf %286, %287 : vector<4x16xf32>
    %c4_i32_94 = arith.constant 4 : i32
    %289 = arith.muli %c2_i32, %c4_i32_94 : i32
    %290 = arith.index_cast %289 : i32 to index
    %c0_95 = arith.constant 0 : index
    %291 = vector.load %arg22[%290, %c0_95] : memref<32x16xf32, #tpu.memory_space<vmem>>, vector<4x16xf32>
    tpu.vector_store %arg22[%290, %c0_95], %288 {strides = array<i32>} : memref<32x16xf32, #tpu.memory_space<vmem>>, vector<4x16xf32>,
    %c3_i32 = arith.constant 3 : i32
    %c4_i32_96 = arith.constant 4 : i32
    %292 = arith.muli %c3_i32, %c4_i32_96 : i32
    %293 = arith.index_cast %292 : i32 to index
    %c0_97 = arith.constant 0 : index
    %294 = vector.load %arg21[%293, %c0_97] : memref<32x48xf32, #tpu.memory_space<vmem>>, vector<4x48xf32>
    %cst_98 = arith.constant dense<0.000000e+00> : vector<4x48xf32>
    %295 = tpu.matmul %288, %66, %cst_98 {dimension_numbers = #tpu.dot_dimension_numbers<[1], [0], [0], [1], [0, 0, 1, 1], [], []>} : vector<4x16xf32>, vector<16x48xf32>, vector<4x48xf32> -> vector<4x48xf32>
    %296 = vector.broadcast %67 : vector<1x48xf32> to vector<4x48xf32>
    %297 = arith.addf %295, %296 : vector<4x48xf32>
    %298 = vector.extract_strided_slice %294 {offsets = [0, 0], sizes = [4, 32], strides = [1, 1]} : vector<4x48xf32> to vector<4x32xf32>
    %299 = vector.extract_strided_slice %297 {offsets = [0, 0], sizes = [4, 32], strides = [1, 1]} : vector<4x48xf32> to vector<4x32xf32>
    %cst_99 = arith.constant dense<0.000000e+00> : vector<4xf32>
    %300 = vector.multi_reduction <add>, %299, %cst_99 [1] : vector<4x32xf32> to vector<4xf32>
    %301 = vector.shape_cast %300 : vector<4xf32> to vector<4x1xf32>
    %cst_100 = arith.constant 3.200000e+01 : f32
    %302 = vector.broadcast %cst_100 : f32 to vector<4x1xf32>
    %303 = arith.divf %301, %302 : vector<4x1xf32>
    %304 = vector.broadcast %303 : vector<4x1xf32> to vector<4x32xf32>
    %305 = arith.subf %299, %304 : vector<4x32xf32>
    %306 = arith.mulf %305, %305 : vector<4x32xf32>
    %cst_101 = arith.constant dense<0.000000e+00> : vector<4xf32>
    %307 = vector.multi_reduction <add>, %306, %cst_101 [1] : vector<4x32xf32> to vector<4xf32>
    %308 = vector.shape_cast %307 : vector<4xf32> to vector<4x1xf32>
    %cst_102 = arith.constant 3.200000e+01 : f32
    %309 = vector.broadcast %cst_102 : f32 to vector<4x1xf32>
    %310 = arith.divf %308, %309 : vector<4x1xf32>
    %311 = vector.broadcast %303 : vector<4x1xf32> to vector<4x32xf32>
    %312 = arith.subf %299, %311 : vector<4x32xf32>
    %cst_103 = arith.constant 9.99999974E-6 : f32
    %313 = vector.broadcast %cst_103 : f32 to vector<4x1xf32>
    %314 = arith.addf %310, %313 : vector<4x1xf32>
    %315 = math.rsqrt %314 : vector<4x1xf32>
    %316 = vector.broadcast %315 : vector<4x1xf32> to vector<4x32xf32>
    %317 = arith.mulf %312, %316 : vector<4x32xf32>
    %318 = vector.broadcast %68 : vector<1x32xf32> to vector<4x32xf32>
    %319 = arith.mulf %317, %318 : vector<4x32xf32>
    %320 = vector.broadcast %69 : vector<1x32xf32> to vector<4x32xf32>
    %321 = arith.addf %319, %320 : vector<4x32xf32>
    %322 = arith.addf %298, %321 : vector<4x32xf32>
    %323 = arith.negf %322 : vector<4x32xf32>
    %324 = math.exp %323 : vector<4x32xf32>
    %cst_104 = arith.constant 1.000000e+00 : f32
    %325 = vector.broadcast %cst_104 : f32 to vector<4x32xf32>
    %326 = arith.addf %325, %324 : vector<4x32xf32>
    %327 = arith.divf %325, %326 : vector<4x32xf32>
    %328 = vector.extract_strided_slice %327 {offsets = [0, 0], sizes = [4, 16], strides = [1, 1]} : vector<4x32xf32> to vector<4x16xf32>
    %329 = vector.extract_strided_slice %327 {offsets = [0, 16], sizes = [4, 16], strides = [1, 1]} : vector<4x32xf32> to vector<4x16xf32>
    %330 = vector.extract_strided_slice %294 {offsets = [0, 32], sizes = [4, 16], strides = [1, 1]} : vector<4x48xf32> to vector<4x16xf32>
    %331 = vector.extract_strided_slice %297 {offsets = [0, 32], sizes = [4, 16], strides = [1, 1]} : vector<4x48xf32> to vector<4x16xf32>
    %cst_105 = arith.constant dense<0.000000e+00> : vector<4xf32>
    %332 = vector.multi_reduction <add>, %331, %cst_105 [1] : vector<4x16xf32> to vector<4xf32>
    %333 = vector.shape_cast %332 : vector<4xf32> to vector<4x1xf32>
    %cst_106 = arith.constant 1.600000e+01 : f32
    %334 = vector.broadcast %cst_106 : f32 to vector<4x1xf32>
    %335 = arith.divf %333, %334 : vector<4x1xf32>
    %336 = vector.broadcast %335 : vector<4x1xf32> to vector<4x16xf32>
    %337 = arith.subf %331, %336 : vector<4x16xf32>
    %338 = arith.mulf %337, %337 : vector<4x16xf32>
    %cst_107 = arith.constant dense<0.000000e+00> : vector<4xf32>
    %339 = vector.multi_reduction <add>, %338, %cst_107 [1] : vector<4x16xf32> to vector<4xf32>
    %340 = vector.shape_cast %339 : vector<4xf32> to vector<4x1xf32>
    %cst_108 = arith.constant 1.600000e+01 : f32
    %341 = vector.broadcast %cst_108 : f32 to vector<4x1xf32>
    %342 = arith.divf %340, %341 : vector<4x1xf32>
    %343 = vector.broadcast %335 : vector<4x1xf32> to vector<4x16xf32>
    %344 = arith.subf %331, %343 : vector<4x16xf32>
    %cst_109 = arith.constant 9.99999974E-6 : f32
    %345 = vector.broadcast %cst_109 : f32 to vector<4x1xf32>
    %346 = arith.addf %342, %345 : vector<4x1xf32>
    %347 = math.rsqrt %346 : vector<4x1xf32>
    %348 = vector.broadcast %347 : vector<4x1xf32> to vector<4x16xf32>
    %349 = arith.mulf %344, %348 : vector<4x16xf32>
    %350 = vector.broadcast %70 : vector<1x16xf32> to vector<4x16xf32>
    %351 = arith.mulf %349, %350 : vector<4x16xf32>
    %352 = vector.broadcast %71 : vector<1x16xf32> to vector<4x16xf32>
    %353 = arith.addf %351, %352 : vector<4x16xf32>
    %354 = arith.mulf %328, %353 : vector<4x16xf32>
    %355 = arith.addf %330, %354 : vector<4x16xf32>
    %356 = math.tanh %355 : vector<4x16xf32>
    %cst_110 = arith.constant 1.000000e+00 : f32
    %357 = vector.broadcast %cst_110 : f32 to vector<4x16xf32>
    %358 = arith.subf %357, %329 : vector<4x16xf32>
    %359 = arith.mulf %358, %356 : vector<4x16xf32>
    %360 = arith.mulf %329, %288 : vector<4x16xf32>
    %361 = arith.addf %359, %360 : vector<4x16xf32>
    %c4_i32_111 = arith.constant 4 : i32
    %362 = arith.muli %c3_i32, %c4_i32_111 : i32
    %363 = arith.index_cast %362 : i32 to index
    %c0_112 = arith.constant 0 : index
    %364 = vector.load %arg22[%363, %c0_112] : memref<32x16xf32, #tpu.memory_space<vmem>>, vector<4x16xf32>
    tpu.vector_store %arg22[%363, %c0_112], %361 {strides = array<i32>} : memref<32x16xf32, #tpu.memory_space<vmem>>, vector<4x16xf32>,
    %c4_i32_113 = arith.constant 4 : i32
    %c4_i32_114 = arith.constant 4 : i32
    %365 = arith.muli %c4_i32_113, %c4_i32_114 : i32
    %366 = arith.index_cast %365 : i32 to index
    %c0_115 = arith.constant 0 : index
    %367 = vector.load %arg21[%366, %c0_115] : memref<32x48xf32, #tpu.memory_space<vmem>>, vector<4x48xf32>
    %cst_116 = arith.constant dense<0.000000e+00> : vector<4x48xf32>
    %368 = tpu.matmul %361, %66, %cst_116 {dimension_numbers = #tpu.dot_dimension_numbers<[1], [0], [0], [1], [0, 0, 1, 1], [], []>} : vector<4x16xf32>, vector<16x48xf32>, vector<4x48xf32> -> vector<4x48xf32>
    %369 = vector.broadcast %67 : vector<1x48xf32> to vector<4x48xf32>
    %370 = arith.addf %368, %369 : vector<4x48xf32>
    %371 = vector.extract_strided_slice %367 {offsets = [0, 0], sizes = [4, 32], strides = [1, 1]} : vector<4x48xf32> to vector<4x32xf32>
    %372 = vector.extract_strided_slice %370 {offsets = [0, 0], sizes = [4, 32], strides = [1, 1]} : vector<4x48xf32> to vector<4x32xf32>
    %cst_117 = arith.constant dense<0.000000e+00> : vector<4xf32>
    %373 = vector.multi_reduction <add>, %372, %cst_117 [1] : vector<4x32xf32> to vector<4xf32>
    %374 = vector.shape_cast %373 : vector<4xf32> to vector<4x1xf32>
    %cst_118 = arith.constant 3.200000e+01 : f32
    %375 = vector.broadcast %cst_118 : f32 to vector<4x1xf32>
    %376 = arith.divf %374, %375 : vector<4x1xf32>
    %377 = vector.broadcast %376 : vector<4x1xf32> to vector<4x32xf32>
    %378 = arith.subf %372, %377 : vector<4x32xf32>
    %379 = arith.mulf %378, %378 : vector<4x32xf32>
    %cst_119 = arith.constant dense<0.000000e+00> : vector<4xf32>
    %380 = vector.multi_reduction <add>, %379, %cst_119 [1] : vector<4x32xf32> to vector<4xf32>
    %381 = vector.shape_cast %380 : vector<4xf32> to vector<4x1xf32>
    %cst_120 = arith.constant 3.200000e+01 : f32
    %382 = vector.broadcast %cst_120 : f32 to vector<4x1xf32>
    %383 = arith.divf %381, %382 : vector<4x1xf32>
    %384 = vector.broadcast %376 : vector<4x1xf32> to vector<4x32xf32>
    %385 = arith.subf %372, %384 : vector<4x32xf32>
    %cst_121 = arith.constant 9.99999974E-6 : f32
    %386 = vector.broadcast %cst_121 : f32 to vector<4x1xf32>
    %387 = arith.addf %383, %386 : vector<4x1xf32>
    %388 = math.rsqrt %387 : vector<4x1xf32>
    %389 = vector.broadcast %388 : vector<4x1xf32> to vector<4x32xf32>
    %390 = arith.mulf %385, %389 : vector<4x32xf32>
    %391 = vector.broadcast %68 : vector<1x32xf32> to vector<4x32xf32>
    %392 = arith.mulf %390, %391 : vector<4x32xf32>
    %393 = vector.broadcast %69 : vector<1x32xf32> to vector<4x32xf32>
    %394 = arith.addf %392, %393 : vector<4x32xf32>
    %395 = arith.addf %371, %394 : vector<4x32xf32>
    %396 = arith.negf %395 : vector<4x32xf32>
    %397 = math.exp %396 : vector<4x32xf32>
    %cst_122 = arith.constant 1.000000e+00 : f32
    %398 = vector.broadcast %cst_122 : f32 to vector<4x32xf32>
    %399 = arith.addf %398, %397 : vector<4x32xf32>
    %400 = arith.divf %398, %399 : vector<4x32xf32>
    %401 = vector.extract_strided_slice %400 {offsets = [0, 0], sizes = [4, 16], strides = [1, 1]} : vector<4x32xf32> to vector<4x16xf32>
    %402 = vector.extract_strided_slice %400 {offsets = [0, 16], sizes = [4, 16], strides = [1, 1]} : vector<4x32xf32> to vector<4x16xf32>
    %403 = vector.extract_strided_slice %367 {offsets = [0, 32], sizes = [4, 16], strides = [1, 1]} : vector<4x48xf32> to vector<4x16xf32>
    %404 = vector.extract_strided_slice %370 {offsets = [0, 32], sizes = [4, 16], strides = [1, 1]} : vector<4x48xf32> to vector<4x16xf32>
    %cst_123 = arith.constant dense<0.000000e+00> : vector<4xf32>
    %405 = vector.multi_reduction <add>, %404, %cst_123 [1] : vector<4x16xf32> to vector<4xf32>
    %406 = vector.shape_cast %405 : vector<4xf32> to vector<4x1xf32>
    %cst_124 = arith.constant 1.600000e+01 : f32
    %407 = vector.broadcast %cst_124 : f32 to vector<4x1xf32>
    %408 = arith.divf %406, %407 : vector<4x1xf32>
    %409 = vector.broadcast %408 : vector<4x1xf32> to vector<4x16xf32>
    %410 = arith.subf %404, %409 : vector<4x16xf32>
    %411 = arith.mulf %410, %410 : vector<4x16xf32>
    %cst_125 = arith.constant dense<0.000000e+00> : vector<4xf32>
    %412 = vector.multi_reduction <add>, %411, %cst_125 [1] : vector<4x16xf32> to vector<4xf32>
    %413 = vector.shape_cast %412 : vector<4xf32> to vector<4x1xf32>
    %cst_126 = arith.constant 1.600000e+01 : f32
    %414 = vector.broadcast %cst_126 : f32 to vector<4x1xf32>
    %415 = arith.divf %413, %414 : vector<4x1xf32>
    %416 = vector.broadcast %408 : vector<4x1xf32> to vector<4x16xf32>
    %417 = arith.subf %404, %416 : vector<4x16xf32>
    %cst_127 = arith.constant 9.99999974E-6 : f32
    %418 = vector.broadcast %cst_127 : f32 to vector<4x1xf32>
    %419 = arith.addf %415, %418 : vector<4x1xf32>
    %420 = math.rsqrt %419 : vector<4x1xf32>
    %421 = vector.broadcast %420 : vector<4x1xf32> to vector<4x16xf32>
    %422 = arith.mulf %417, %421 : vector<4x16xf32>
    %423 = vector.broadcast %70 : vector<1x16xf32> to vector<4x16xf32>
    %424 = arith.mulf %422, %423 : vector<4x16xf32>
    %425 = vector.broadcast %71 : vector<1x16xf32> to vector<4x16xf32>
    %426 = arith.addf %424, %425 : vector<4x16xf32>
    %427 = arith.mulf %401, %426 : vector<4x16xf32>
    %428 = arith.addf %403, %427 : vector<4x16xf32>
    %429 = math.tanh %428 : vector<4x16xf32>
    %cst_128 = arith.constant 1.000000e+00 : f32
    %430 = vector.broadcast %cst_128 : f32 to vector<4x16xf32>
    %431 = arith.subf %430, %402 : vector<4x16xf32>
    %432 = arith.mulf %431, %429 : vector<4x16xf32>
    %433 = arith.mulf %402, %361 : vector<4x16xf32>
    %434 = arith.addf %432, %433 : vector<4x16xf32>
    %c4_i32_129 = arith.constant 4 : i32
    %435 = arith.muli %c4_i32_113, %c4_i32_129 : i32
    %436 = arith.index_cast %435 : i32 to index
    %c0_130 = arith.constant 0 : index
    %437 = vector.load %arg22[%436, %c0_130] : memref<32x16xf32, #tpu.memory_space<vmem>>, vector<4x16xf32>
    tpu.vector_store %arg22[%436, %c0_130], %434 {strides = array<i32>} : memref<32x16xf32, #tpu.memory_space<vmem>>, vector<4x16xf32>,
    %c5_i32 = arith.constant 5 : i32
    %c4_i32_131 = arith.constant 4 : i32
    %438 = arith.muli %c5_i32, %c4_i32_131 : i32
    %439 = arith.index_cast %438 : i32 to index
    %c0_132 = arith.constant 0 : index
    %440 = vector.load %arg21[%439, %c0_132] : memref<32x48xf32, #tpu.memory_space<vmem>>, vector<4x48xf32>
    %cst_133 = arith.constant dense<0.000000e+00> : vector<4x48xf32>
    %441 = tpu.matmul %434, %66, %cst_133 {dimension_numbers = #tpu.dot_dimension_numbers<[1], [0], [0], [1], [0, 0, 1, 1], [], []>} : vector<4x16xf32>, vector<16x48xf32>, vector<4x48xf32> -> vector<4x48xf32>
    %442 = vector.broadcast %67 : vector<1x48xf32> to vector<4x48xf32>
    %443 = arith.addf %441, %442 : vector<4x48xf32>
    %444 = vector.extract_strided_slice %440 {offsets = [0, 0], sizes = [4, 32], strides = [1, 1]} : vector<4x48xf32> to vector<4x32xf32>
    %445 = vector.extract_strided_slice %443 {offsets = [0, 0], sizes = [4, 32], strides = [1, 1]} : vector<4x48xf32> to vector<4x32xf32>
    %cst_134 = arith.constant dense<0.000000e+00> : vector<4xf32>
    %446 = vector.multi_reduction <add>, %445, %cst_134 [1] : vector<4x32xf32> to vector<4xf32>
    %447 = vector.shape_cast %446 : vector<4xf32> to vector<4x1xf32>
    %cst_135 = arith.constant 3.200000e+01 : f32
    %448 = vector.broadcast %cst_135 : f32 to vector<4x1xf32>
    %449 = arith.divf %447, %448 : vector<4x1xf32>
    %450 = vector.broadcast %449 : vector<4x1xf32> to vector<4x32xf32>
    %451 = arith.subf %445, %450 : vector<4x32xf32>
    %452 = arith.mulf %451, %451 : vector<4x32xf32>
    %cst_136 = arith.constant dense<0.000000e+00> : vector<4xf32>
    %453 = vector.multi_reduction <add>, %452, %cst_136 [1] : vector<4x32xf32> to vector<4xf32>
    %454 = vector.shape_cast %453 : vector<4xf32> to vector<4x1xf32>
    %cst_137 = arith.constant 3.200000e+01 : f32
    %455 = vector.broadcast %cst_137 : f32 to vector<4x1xf32>
    %456 = arith.divf %454, %455 : vector<4x1xf32>
    %457 = vector.broadcast %449 : vector<4x1xf32> to vector<4x32xf32>
    %458 = arith.subf %445, %457 : vector<4x32xf32>
    %cst_138 = arith.constant 9.99999974E-6 : f32
    %459 = vector.broadcast %cst_138 : f32 to vector<4x1xf32>
    %460 = arith.addf %456, %459 : vector<4x1xf32>
    %461 = math.rsqrt %460 : vector<4x1xf32>
    %462 = vector.broadcast %461 : vector<4x1xf32> to vector<4x32xf32>
    %463 = arith.mulf %458, %462 : vector<4x32xf32>
    %464 = vector.broadcast %68 : vector<1x32xf32> to vector<4x32xf32>
    %465 = arith.mulf %463, %464 : vector<4x32xf32>
    %466 = vector.broadcast %69 : vector<1x32xf32> to vector<4x32xf32>
    %467 = arith.addf %465, %466 : vector<4x32xf32>
    %468 = arith.addf %444, %467 : vector<4x32xf32>
    %469 = arith.negf %468 : vector<4x32xf32>
    %470 = math.exp %469 : vector<4x32xf32>
    %cst_139 = arith.constant 1.000000e+00 : f32
    %471 = vector.broadcast %cst_139 : f32 to vector<4x32xf32>
    %472 = arith.addf %471, %470 : vector<4x32xf32>
    %473 = arith.divf %471, %472 : vector<4x32xf32>
    %474 = vector.extract_strided_slice %473 {offsets = [0, 0], sizes = [4, 16], strides = [1, 1]} : vector<4x32xf32> to vector<4x16xf32>
    %475 = vector.extract_strided_slice %473 {offsets = [0, 16], sizes = [4, 16], strides = [1, 1]} : vector<4x32xf32> to vector<4x16xf32>
    %476 = vector.extract_strided_slice %440 {offsets = [0, 32], sizes = [4, 16], strides = [1, 1]} : vector<4x48xf32> to vector<4x16xf32>
    %477 = vector.extract_strided_slice %443 {offsets = [0, 32], sizes = [4, 16], strides = [1, 1]} : vector<4x48xf32> to vector<4x16xf32>
    %cst_140 = arith.constant dense<0.000000e+00> : vector<4xf32>
    %478 = vector.multi_reduction <add>, %477, %cst_140 [1] : vector<4x16xf32> to vector<4xf32>
    %479 = vector.shape_cast %478 : vector<4xf32> to vector<4x1xf32>
    %cst_141 = arith.constant 1.600000e+01 : f32
    %480 = vector.broadcast %cst_141 : f32 to vector<4x1xf32>
    %481 = arith.divf %479, %480 : vector<4x1xf32>
    %482 = vector.broadcast %481 : vector<4x1xf32> to vector<4x16xf32>
    %483 = arith.subf %477, %482 : vector<4x16xf32>
    %484 = arith.mulf %483, %483 : vector<4x16xf32>
    %cst_142 = arith.constant dense<0.000000e+00> : vector<4xf32>
    %485 = vector.multi_reduction <add>, %484, %cst_142 [1] : vector<4x16xf32> to vector<4xf32>
    %486 = vector.shape_cast %485 : vector<4xf32> to vector<4x1xf32>
    %cst_143 = arith.constant 1.600000e+01 : f32
    %487 = vector.broadcast %cst_143 : f32 to vector<4x1xf32>
    %488 = arith.divf %486, %487 : vector<4x1xf32>
    %489 = vector.broadcast %481 : vector<4x1xf32> to vector<4x16xf32>
    %490 = arith.subf %477, %489 : vector<4x16xf32>
    %cst_144 = arith.constant 9.99999974E-6 : f32
    %491 = vector.broadcast %cst_144 : f32 to vector<4x1xf32>
    %492 = arith.addf %488, %491 : vector<4x1xf32>
    %493 = math.rsqrt %492 : vector<4x1xf32>
    %494 = vector.broadcast %493 : vector<4x1xf32> to vector<4x16xf32>
    %495 = arith.mulf %490, %494 : vector<4x16xf32>
    %496 = vector.broadcast %70 : vector<1x16xf32> to vector<4x16xf32>
    %497 = arith.mulf %495, %496 : vector<4x16xf32>
    %498 = vector.broadcast %71 : vector<1x16xf32> to vector<4x16xf32>
    %499 = arith.addf %497, %498 : vector<4x16xf32>
    %500 = arith.mulf %474, %499 : vector<4x16xf32>
    %501 = arith.addf %476, %500 : vector<4x16xf32>
    %502 = math.tanh %501 : vector<4x16xf32>
    %cst_145 = arith.constant 1.000000e+00 : f32
    %503 = vector.broadcast %cst_145 : f32 to vector<4x16xf32>
    %504 = arith.subf %503, %475 : vector<4x16xf32>
    %505 = arith.mulf %504, %502 : vector<4x16xf32>
    %506 = arith.mulf %475, %434 : vector<4x16xf32>
    %507 = arith.addf %505, %506 : vector<4x16xf32>
    %c4_i32_146 = arith.constant 4 : i32
    %508 = arith.muli %c5_i32, %c4_i32_146 : i32
    %509 = arith.index_cast %508 : i32 to index
    %c0_147 = arith.constant 0 : index
    %510 = vector.load %arg22[%509, %c0_147] : memref<32x16xf32, #tpu.memory_space<vmem>>, vector<4x16xf32>
    tpu.vector_store %arg22[%509, %c0_147], %507 {strides = array<i32>} : memref<32x16xf32, #tpu.memory_space<vmem>>, vector<4x16xf32>,
    %c6_i32 = arith.constant 6 : i32
    %c4_i32_148 = arith.constant 4 : i32
    %511 = arith.muli %c6_i32, %c4_i32_148 : i32
    %512 = arith.index_cast %511 : i32 to index
    %c0_149 = arith.constant 0 : index
    %513 = vector.load %arg21[%512, %c0_149] : memref<32x48xf32, #tpu.memory_space<vmem>>, vector<4x48xf32>
    %cst_150 = arith.constant dense<0.000000e+00> : vector<4x48xf32>
    %514 = tpu.matmul %507, %66, %cst_150 {dimension_numbers = #tpu.dot_dimension_numbers<[1], [0], [0], [1], [0, 0, 1, 1], [], []>} : vector<4x16xf32>, vector<16x48xf32>, vector<4x48xf32> -> vector<4x48xf32>
    %515 = vector.broadcast %67 : vector<1x48xf32> to vector<4x48xf32>
    %516 = arith.addf %514, %515 : vector<4x48xf32>
    %517 = vector.extract_strided_slice %513 {offsets = [0, 0], sizes = [4, 32], strides = [1, 1]} : vector<4x48xf32> to vector<4x32xf32>
    %518 = vector.extract_strided_slice %516 {offsets = [0, 0], sizes = [4, 32], strides = [1, 1]} : vector<4x48xf32> to vector<4x32xf32>
    %cst_151 = arith.constant dense<0.000000e+00> : vector<4xf32>
    %519 = vector.multi_reduction <add>, %518, %cst_151 [1] : vector<4x32xf32> to vector<4xf32>
    %520 = vector.shape_cast %519 : vector<4xf32> to vector<4x1xf32>
    %cst_152 = arith.constant 3.200000e+01 : f32
    %521 = vector.broadcast %cst_152 : f32 to vector<4x1xf32>
    %522 = arith.divf %520, %521 : vector<4x1xf32>
    %523 = vector.broadcast %522 : vector<4x1xf32> to vector<4x32xf32>
    %524 = arith.subf %518, %523 : vector<4x32xf32>
    %525 = arith.mulf %524, %524 : vector<4x32xf32>
    %cst_153 = arith.constant dense<0.000000e+00> : vector<4xf32>
    %526 = vector.multi_reduction <add>, %525, %cst_153 [1] : vector<4x32xf32> to vector<4xf32>
    %527 = vector.shape_cast %526 : vector<4xf32> to vector<4x1xf32>
    %cst_154 = arith.constant 3.200000e+01 : f32
    %528 = vector.broadcast %cst_154 : f32 to vector<4x1xf32>
    %529 = arith.divf %527, %528 : vector<4x1xf32>
    %530 = vector.broadcast %522 : vector<4x1xf32> to vector<4x32xf32>
    %531 = arith.subf %518, %530 : vector<4x32xf32>
    %cst_155 = arith.constant 9.99999974E-6 : f32
    %532 = vector.broadcast %cst_155 : f32 to vector<4x1xf32>
    %533 = arith.addf %529, %532 : vector<4x1xf32>
    %534 = math.rsqrt %533 : vector<4x1xf32>
    %535 = vector.broadcast %534 : vector<4x1xf32> to vector<4x32xf32>
    %536 = arith.mulf %531, %535 : vector<4x32xf32>
    %537 = vector.broadcast %68 : vector<1x32xf32> to vector<4x32xf32>
    %538 = arith.mulf %536, %537 : vector<4x32xf32>
    %539 = vector.broadcast %69 : vector<1x32xf32> to vector<4x32xf32>
    %540 = arith.addf %538, %539 : vector<4x32xf32>
    %541 = arith.addf %517, %540 : vector<4x32xf32>
    %542 = arith.negf %541 : vector<4x32xf32>
    %543 = math.exp %542 : vector<4x32xf32>
    %cst_156 = arith.constant 1.000000e+00 : f32
    %544 = vector.broadcast %cst_156 : f32 to vector<4x32xf32>
    %545 = arith.addf %544, %543 : vector<4x32xf32>
    %546 = arith.divf %544, %545 : vector<4x32xf32>
    %547 = vector.extract_strided_slice %546 {offsets = [0, 0], sizes = [4, 16], strides = [1, 1]} : vector<4x32xf32> to vector<4x16xf32>
    %548 = vector.extract_strided_slice %546 {offsets = [0, 16], sizes = [4, 16], strides = [1, 1]} : vector<4x32xf32> to vector<4x16xf32>
    %549 = vector.extract_strided_slice %513 {offsets = [0, 32], sizes = [4, 16], strides = [1, 1]} : vector<4x48xf32> to vector<4x16xf32>
    %550 = vector.extract_strided_slice %516 {offsets = [0, 32], sizes = [4, 16], strides = [1, 1]} : vector<4x48xf32> to vector<4x16xf32>
    %cst_157 = arith.constant dense<0.000000e+00> : vector<4xf32>
    %551 = vector.multi_reduction <add>, %550, %cst_157 [1] : vector<4x16xf32> to vector<4xf32>
    %552 = vector.shape_cast %551 : vector<4xf32> to vector<4x1xf32>
    %cst_158 = arith.constant 1.600000e+01 : f32
    %553 = vector.broadcast %cst_158 : f32 to vector<4x1xf32>
    %554 = arith.divf %552, %553 : vector<4x1xf32>
    %555 = vector.broadcast %554 : vector<4x1xf32> to vector<4x16xf32>
    %556 = arith.subf %550, %555 : vector<4x16xf32>
    %557 = arith.mulf %556, %556 : vector<4x16xf32>
    %cst_159 = arith.constant dense<0.000000e+00> : vector<4xf32>
    %558 = vector.multi_reduction <add>, %557, %cst_159 [1] : vector<4x16xf32> to vector<4xf32>
    %559 = vector.shape_cast %558 : vector<4xf32> to vector<4x1xf32>
    %cst_160 = arith.constant 1.600000e+01 : f32
    %560 = vector.broadcast %cst_160 : f32 to vector<4x1xf32>
    %561 = arith.divf %559, %560 : vector<4x1xf32>
    %562 = vector.broadcast %554 : vector<4x1xf32> to vector<4x16xf32>
    %563 = arith.subf %550, %562 : vector<4x16xf32>
    %cst_161 = arith.constant 9.99999974E-6 : f32
    %564 = vector.broadcast %cst_161 : f32 to vector<4x1xf32>
    %565 = arith.addf %561, %564 : vector<4x1xf32>
    %566 = math.rsqrt %565 : vector<4x1xf32>
    %567 = vector.broadcast %566 : vector<4x1xf32> to vector<4x16xf32>
    %568 = arith.mulf %563, %567 : vector<4x16xf32>
    %569 = vector.broadcast %70 : vector<1x16xf32> to vector<4x16xf32>
    %570 = arith.mulf %568, %569 : vector<4x16xf32>
    %571 = vector.broadcast %71 : vector<1x16xf32> to vector<4x16xf32>
    %572 = arith.addf %570, %571 : vector<4x16xf32>
    %573 = arith.mulf %547, %572 : vector<4x16xf32>
    %574 = arith.addf %549, %573 : vector<4x16xf32>
    %575 = math.tanh %574 : vector<4x16xf32>
    %cst_162 = arith.constant 1.000000e+00 : f32
    %576 = vector.broadcast %cst_162 : f32 to vector<4x16xf32>
    %577 = arith.subf %576, %548 : vector<4x16xf32>
    %578 = arith.mulf %577, %575 : vector<4x16xf32>
    %579 = arith.mulf %548, %507 : vector<4x16xf32>
    %580 = arith.addf %578, %579 : vector<4x16xf32>
    %c4_i32_163 = arith.constant 4 : i32
    %581 = arith.muli %c6_i32, %c4_i32_163 : i32
    %582 = arith.index_cast %581 : i32 to index
    %c0_164 = arith.constant 0 : index
    %583 = vector.load %arg22[%582, %c0_164] : memref<32x16xf32, #tpu.memory_space<vmem>>, vector<4x16xf32>
    tpu.vector_store %arg22[%582, %c0_164], %580 {strides = array<i32>} : memref<32x16xf32, #tpu.memory_space<vmem>>, vector<4x16xf32>,
    %c7_i32 = arith.constant 7 : i32
    %c4_i32_165 = arith.constant 4 : i32
    %584 = arith.muli %c7_i32, %c4_i32_165 : i32
    %585 = arith.index_cast %584 : i32 to index
    %c0_166 = arith.constant 0 : index
    %586 = vector.load %arg21[%585, %c0_166] : memref<32x48xf32, #tpu.memory_space<vmem>>, vector<4x48xf32>
    %cst_167 = arith.constant dense<0.000000e+00> : vector<4x48xf32>
    %587 = tpu.matmul %580, %66, %cst_167 {dimension_numbers = #tpu.dot_dimension_numbers<[1], [0], [0], [1], [0, 0, 1, 1], [], []>} : vector<4x16xf32>, vector<16x48xf32>, vector<4x48xf32> -> vector<4x48xf32>
    %588 = vector.broadcast %67 : vector<1x48xf32> to vector<4x48xf32>
    %589 = arith.addf %587, %588 : vector<4x48xf32>
    %590 = vector.extract_strided_slice %586 {offsets = [0, 0], sizes = [4, 32], strides = [1, 1]} : vector<4x48xf32> to vector<4x32xf32>
    %591 = vector.extract_strided_slice %589 {offsets = [0, 0], sizes = [4, 32], strides = [1, 1]} : vector<4x48xf32> to vector<4x32xf32>
    %cst_168 = arith.constant dense<0.000000e+00> : vector<4xf32>
    %592 = vector.multi_reduction <add>, %591, %cst_168 [1] : vector<4x32xf32> to vector<4xf32>
    %593 = vector.shape_cast %592 : vector<4xf32> to vector<4x1xf32>
    %cst_169 = arith.constant 3.200000e+01 : f32
    %594 = vector.broadcast %cst_169 : f32 to vector<4x1xf32>
    %595 = arith.divf %593, %594 : vector<4x1xf32>
    %596 = vector.broadcast %595 : vector<4x1xf32> to vector<4x32xf32>
    %597 = arith.subf %591, %596 : vector<4x32xf32>
    %598 = arith.mulf %597, %597 : vector<4x32xf32>
    %cst_170 = arith.constant dense<0.000000e+00> : vector<4xf32>
    %599 = vector.multi_reduction <add>, %598, %cst_170 [1] : vector<4x32xf32> to vector<4xf32>
    %600 = vector.shape_cast %599 : vector<4xf32> to vector<4x1xf32>
    %cst_171 = arith.constant 3.200000e+01 : f32
    %601 = vector.broadcast %cst_171 : f32 to vector<4x1xf32>
    %602 = arith.divf %600, %601 : vector<4x1xf32>
    %603 = vector.broadcast %595 : vector<4x1xf32> to vector<4x32xf32>
    %604 = arith.subf %591, %603 : vector<4x32xf32>
    %cst_172 = arith.constant 9.99999974E-6 : f32
    %605 = vector.broadcast %cst_172 : f32 to vector<4x1xf32>
    %606 = arith.addf %602, %605 : vector<4x1xf32>
    %607 = math.rsqrt %606 : vector<4x1xf32>
    %608 = vector.broadcast %607 : vector<4x1xf32> to vector<4x32xf32>
    %609 = arith.mulf %604, %608 : vector<4x32xf32>
    %610 = vector.broadcast %68 : vector<1x32xf32> to vector<4x32xf32>
    %611 = arith.mulf %609, %610 : vector<4x32xf32>
    %612 = vector.broadcast %69 : vector<1x32xf32> to vector<4x32xf32>
    %613 = arith.addf %611, %612 : vector<4x32xf32>
    %614 = arith.addf %590, %613 : vector<4x32xf32>
    %615 = arith.negf %614 : vector<4x32xf32>
    %616 = math.exp %615 : vector<4x32xf32>
    %cst_173 = arith.constant 1.000000e+00 : f32
    %617 = vector.broadcast %cst_173 : f32 to vector<4x32xf32>
    %618 = arith.addf %617, %616 : vector<4x32xf32>
    %619 = arith.divf %617, %618 : vector<4x32xf32>
    %620 = vector.extract_strided_slice %619 {offsets = [0, 0], sizes = [4, 16], strides = [1, 1]} : vector<4x32xf32> to vector<4x16xf32>
    %621 = vector.extract_strided_slice %619 {offsets = [0, 16], sizes = [4, 16], strides = [1, 1]} : vector<4x32xf32> to vector<4x16xf32>
    %622 = vector.extract_strided_slice %586 {offsets = [0, 32], sizes = [4, 16], strides = [1, 1]} : vector<4x48xf32> to vector<4x16xf32>
    %623 = vector.extract_strided_slice %589 {offsets = [0, 32], sizes = [4, 16], strides = [1, 1]} : vector<4x48xf32> to vector<4x16xf32>
    %cst_174 = arith.constant dense<0.000000e+00> : vector<4xf32>
    %624 = vector.multi_reduction <add>, %623, %cst_174 [1] : vector<4x16xf32> to vector<4xf32>
    %625 = vector.shape_cast %624 : vector<4xf32> to vector<4x1xf32>
    %cst_175 = arith.constant 1.600000e+01 : f32
    %626 = vector.broadcast %cst_175 : f32 to vector<4x1xf32>
    %627 = arith.divf %625, %626 : vector<4x1xf32>
    %628 = vector.broadcast %627 : vector<4x1xf32> to vector<4x16xf32>
    %629 = arith.subf %623, %628 : vector<4x16xf32>
    %630 = arith.mulf %629, %629 : vector<4x16xf32>
    %cst_176 = arith.constant dense<0.000000e+00> : vector<4xf32>
    %631 = vector.multi_reduction <add>, %630, %cst_176 [1] : vector<4x16xf32> to vector<4xf32>
    %632 = vector.shape_cast %631 : vector<4xf32> to vector<4x1xf32>
    %cst_177 = arith.constant 1.600000e+01 : f32
    %633 = vector.broadcast %cst_177 : f32 to vector<4x1xf32>
    %634 = arith.divf %632, %633 : vector<4x1xf32>
    %635 = vector.broadcast %627 : vector<4x1xf32> to vector<4x16xf32>
    %636 = arith.subf %623, %635 : vector<4x16xf32>
    %cst_178 = arith.constant 9.99999974E-6 : f32
    %637 = vector.broadcast %cst_178 : f32 to vector<4x1xf32>
    %638 = arith.addf %634, %637 : vector<4x1xf32>
    %639 = math.rsqrt %638 : vector<4x1xf32>
    %640 = vector.broadcast %639 : vector<4x1xf32> to vector<4x16xf32>
    %641 = arith.mulf %636, %640 : vector<4x16xf32>
    %642 = vector.broadcast %70 : vector<1x16xf32> to vector<4x16xf32>
    %643 = arith.mulf %641, %642 : vector<4x16xf32>
    %644 = vector.broadcast %71 : vector<1x16xf32> to vector<4x16xf32>
    %645 = arith.addf %643, %644 : vector<4x16xf32>
    %646 = arith.mulf %620, %645 : vector<4x16xf32>
    %647 = arith.addf %622, %646 : vector<4x16xf32>
    %648 = math.tanh %647 : vector<4x16xf32>
    %cst_179 = arith.constant 1.000000e+00 : f32
    %649 = vector.broadcast %cst_179 : f32 to vector<4x16xf32>
    %650 = arith.subf %649, %621 : vector<4x16xf32>
    %651 = arith.mulf %650, %648 : vector<4x16xf32>
    %652 = arith.mulf %621, %580 : vector<4x16xf32>
    %653 = arith.addf %651, %652 : vector<4x16xf32>
    %c4_i32_180 = arith.constant 4 : i32
    %654 = arith.muli %c7_i32, %c4_i32_180 : i32
    %655 = arith.index_cast %654 : i32 to index
    %c0_181 = arith.constant 0 : index
    %656 = vector.load %arg22[%655, %c0_181] : memref<32x16xf32, #tpu.memory_space<vmem>>, vector<4x16xf32>
    tpu.vector_store %arg22[%655, %c0_181], %653 {strides = array<i32>} : memref<32x16xf32, #tpu.memory_space<vmem>>, vector<4x16xf32>,
    %c8_i32 = arith.constant 8 : i32
    %c0_182 = arith.constant 0 : index
    %c0_183 = arith.constant 0 : index
    %657 = vector.load %arg22[%c0_182, %c0_183] : memref<32x16xf32, #tpu.memory_space<vmem>>, vector<32x16xf32>
    %c0_184 = arith.constant 0 : index
    %c0_185 = arith.constant 0 : index
    %658 = vector.load %arg18[%c0_184, %c0_185] : memref<16x32xf32, #tpu.memory_space<vmem>>, vector<16x32xf32>
    %cst_186 = arith.constant dense<0.000000e+00> : vector<16x16xf32>
    %659 = tpu.matmul %658, %657, %cst_186 {dimension_numbers = #tpu.dot_dimension_numbers<[1], [0], [0], [1], [0, 0, 1, 1], [], []>} : vector<16x32xf32>, vector<32x16xf32>, vector<16x16xf32> -> vector<16x16xf32>
    %c0_187 = arith.constant 0 : index
    %c0_188 = arith.constant 0 : index
    %660 = vector.load %arg19[%c0_187, %c0_188] : memref<16x32xf32, #tpu.memory_space<vmem>>, vector<16x32xf32>
    %cst_189 = arith.constant dense<0.000000e+00> : vector<16x16xf32>
    %661 = tpu.matmul %660, %657, %cst_189 {dimension_numbers = #tpu.dot_dimension_numbers<[1], [0], [0], [1], [0, 0, 1, 1], [], []>} : vector<16x32xf32>, vector<32x16xf32>, vector<16x16xf32> -> vector<16x16xf32>
    %662 = tpu.concatenate %659, %661 in 1 : vector<16x16xf32>, vector<16x16xf32> -> vector<16x32xf32>
    %c0_190 = arith.constant 0 : index
    %c0_191 = arith.constant 0 : index
    %663 = vector.load %arg15[%c0_190, %c0_191] : memref<1x32xf32, #tpu.memory_space<vmem>>, vector<1x32xf32>
    %c0_192 = arith.constant 0 : index
    %c0_193 = arith.constant 0 : index
    %664 = vector.load %arg16[%c0_192, %c0_193] : memref<1x32xf32, #tpu.memory_space<vmem>>, vector<1x32xf32>
    %cst_194 = arith.constant dense<0.000000e+00> : vector<16xf32>
    %665 = vector.multi_reduction <add>, %662, %cst_194 [1] : vector<16x32xf32> to vector<16xf32>
    %666 = vector.shape_cast %665 : vector<16xf32> to vector<16x1xf32>
    %cst_195 = arith.constant 3.200000e+01 : f32
    %667 = vector.broadcast %cst_195 : f32 to vector<16x1xf32>
    %668 = arith.divf %666, %667 : vector<16x1xf32>
    %669 = vector.broadcast %668 : vector<16x1xf32> to vector<16x32xf32>
    %670 = arith.subf %662, %669 : vector<16x32xf32>
    %671 = arith.mulf %670, %670 : vector<16x32xf32>
    %cst_196 = arith.constant dense<0.000000e+00> : vector<16xf32>
    %672 = vector.multi_reduction <add>, %671, %cst_196 [1] : vector<16x32xf32> to vector<16xf32>
    %673 = vector.shape_cast %672 : vector<16xf32> to vector<16x1xf32>
    %cst_197 = arith.constant 3.200000e+01 : f32
    %674 = vector.broadcast %cst_197 : f32 to vector<16x1xf32>
    %675 = arith.divf %673, %674 : vector<16x1xf32>
    %676 = vector.broadcast %668 : vector<16x1xf32> to vector<16x32xf32>
    %677 = arith.subf %662, %676 : vector<16x32xf32>
    %cst_198 = arith.constant 9.99999974E-6 : f32
    %678 = vector.broadcast %cst_198 : f32 to vector<16x1xf32>
    %679 = arith.addf %675, %678 : vector<16x1xf32>
    %680 = math.rsqrt %679 : vector<16x1xf32>
    %681 = vector.broadcast %680 : vector<16x1xf32> to vector<16x32xf32>
    %682 = arith.mulf %677, %681 : vector<16x32xf32>
    %683 = vector.broadcast %663 : vector<1x32xf32> to vector<16x32xf32>
    %684 = arith.mulf %682, %683 : vector<16x32xf32>
    %685 = vector.broadcast %664 : vector<1x32xf32> to vector<16x32xf32>
    %686 = arith.addf %684, %685 : vector<16x32xf32>
    %c0_199 = arith.constant 0 : index
    %c0_200 = arith.constant 0 : index
    %687 = vector.load %arg20[%c0_199, %c0_200] : memref<16x32xf32, #tpu.memory_space<vmem>>, vector<16x32xf32>
    tpu.vector_store %arg20[%c0_199, %c0_200], %686 {strides = array<i32>} : memref<16x32xf32, #tpu.memory_space<vmem>>, vector<16x32xf32>,
    return
  }
}

</mosaic_0001>

<llo_original>
// kernel: cnn_bigru_forward.1
$region0: #{cnn_bigru_forward.1}
  #allocation0 [shape = 'u32[]', space=smem, size = 0x4, offset = 0x4, fixed_abs, tag = 'smem constant byte address 0x4 - core index']
  #allocation1 [shape = 'u32[144,128]{1,0:T(1,128)}', space=vmem, size = 0x12000, scoped, tag = 'internal scratch']
  #allocation2 [shape = 'f32[32,48]{1,0:T(8,128)}', space=vmem, size = 0x4000, scoped, tag = 'scratch operand']
  #allocation3 [shape = 'f32[32,16]{1,0:T(8,128)}', space=vmem, size = 0x4000, scoped, tag = 'scratch operand']
  %s0 = inlined_call_operand.vmem [shape: bf16[16,84], index: 0, kind: input, shape index: {}]
  %s1 = inlined_call_operand.vmem [shape: bf16[84,12], index: 1, kind: input, shape index: {}]
  %s2 = inlined_call_operand.vmem [shape: f32[1,12], index: 2, kind: input, shape index: {}]
  %s3 = inlined_call_operand.vmem [shape: bf16[12,48], index: 3, kind: input, shape index: {}]
  %s4 = inlined_call_operand.vmem [shape: f32[1,48], index: 4, kind: input, shape index: {}]
  %s5 = inlined_call_operand.vmem [shape: f32[1,32], index: 5, kind: input, shape index: {}]
  %s6 = inlined_call_operand.vmem [shape: f32[1,32], index: 6, kind: input, shape index: {}]
  %s7 = inlined_call_operand.vmem [shape: f32[1,16], index: 7, kind: input, shape index: {}]
  %s8 = inlined_call_operand.vmem [shape: f32[1,16], index: 8, kind: input, shape index: {}]
  %s9 = inlined_call_operand.vmem [shape: f32[16,48], index: 9, kind: input, shape index: {}]
  %s10 = inlined_call_operand.vmem [shape: f32[1,48], index: 10, kind: input, shape index: {}]
  %s11 = inlined_call_operand.vmem [shape: f32[1,32], index: 11, kind: input, shape index: {}]
  %s12 = inlined_call_operand.vmem [shape: f32[1,32], index: 12, kind: input, shape index: {}]
  %s13 = inlined_call_operand.vmem [shape: f32[1,16], index: 13, kind: input, shape index: {}]
  %s14 = inlined_call_operand.vmem [shape: f32[1,16], index: 14, kind: input, shape index: {}]
  %s15 = inlined_call_operand.vmem [shape: f32[1,32], index: 15, kind: input, shape index: {}]
  %s16 = inlined_call_operand.vmem [shape: f32[1,32], index: 16, kind: input, shape index: {}]
  %s17 = inlined_call_operand.vmem [shape: f32[32,16], index: 17, kind: input, shape index: {}]
  %s18 = inlined_call_operand.vmem [shape: f32[16,32], index: 18, kind: input, shape index: {}]
  %s19 = inlined_call_operand.vmem [shape: f32[16,32], index: 19, kind: input, shape index: {}]
  %s20 = inlined_call_operand.vmem [shape: f32[16,32], index: 20, kind: output, shape index: {}]
  %s21 = sld [smem:[#allocation0]]
  $region90: #{cnn_bigru_forward.1} parent=0
    _
  %s23 = ssub.s32 1, %s21
  %s24 = scalar_select 0, %s23, %s21
  // Predicated region
  $region2: #{cnn_bigru_forward.1} parent=0 // pred_check
    _
  $region3: #{cnn_bigru_forward.1} parent=0 // pred_check_branch
    %26 = sbr.rel (0) target = $region5
  $region4: #{cnn_bigru_forward.1} parent=0 // pred_region
    _
  $region5: #{cnn_bigru_forward.1} parent=0 // pred_fallthru
    _
  // Predicated region
  $region6: #{cnn_bigru_forward.1} parent=0 // pred_check
    _
  $region7: #{cnn_bigru_forward.1} parent=0 // pred_check_branch
    %28 = sbr.rel (0) target = $region9
  $region8: #{cnn_bigru_forward.1} parent=0 // pred_region
    _
  $region9: #{cnn_bigru_forward.1} parent=0 // pred_fallthru
    _
  // Predicated region
  $region10: #{cnn_bigru_forward.1} parent=0 // pred_check
    _
  $region11: #{cnn_bigru_forward.1} parent=0 // pred_check_branch
    %30 = sbr.rel (0) target = $region13
  $region12: #{cnn_bigru_forward.1} parent=0 // pred_region
    _
  $region13: #{cnn_bigru_forward.1} parent=0 // pred_fallthru
    _
  // Predicated region
  $region14: #{cnn_bigru_forward.1} parent=0 // pred_check
    _
  $region15: #{cnn_bigru_forward.1} parent=0 // pred_check_branch
    %32 = sbr.rel (0) target = $region17
  $region16: #{cnn_bigru_forward.1} parent=0 // pred_region
    _
  $region17: #{cnn_bigru_forward.1} parent=0 // pred_fallthru
    _
  // Predicated region
  $region18: #{cnn_bigru_forward.1} parent=0 // pred_check
    _
  $region19: #{cnn_bigru_forward.1} parent=0 // pred_check_branch
    %34 = sbr.rel (0) target = $region21
  $region20: #{cnn_bigru_forward.1} parent=0 // pred_region
    _
  $region21: #{cnn_bigru_forward.1} parent=0 // pred_fallthru
    _
  // Predicated region
  $region22: #{cnn_bigru_forward.1} parent=0 // pred_check
    _
  $region23: #{cnn_bigru_forward.1} parent=0 // pred_check_branch
    %36 = sbr.rel (0) target = $region25
  $region24: #{cnn_bigru_forward.1} parent=0 // pred_region
    _
  $region25: #{cnn_bigru_forward.1} parent=0 // pred_fallthru
    _
  // Predicated region
  $region26: #{cnn_bigru_forward.1} parent=0 // pred_check
    _
  $region27: #{cnn_bigru_forward.1} parent=0 // pred_check_branch
    %38 = sbr.rel (0) target = $region29
  $region28: #{cnn_bigru_forward.1} parent=0 // pred_region
    _
  $region29: #{cnn_bigru_forward.1} parent=0 // pred_fallthru
    _
  // Predicated region
  $region30: #{cnn_bigru_forward.1} parent=0 // pred_check
    _
  $region31: #{cnn_bigru_forward.1} parent=0 // pred_check_branch
    %40 = sbr.rel (0) target = $region33
  $region32: #{cnn_bigru_forward.1} parent=0 // pred_region
    _
  $region33: #{cnn_bigru_forward.1} parent=0 // pred_fallthru
    _
  // Predicated region
  $region34: #{cnn_bigru_forward.1} parent=0 // pred_check
    _
  $region35: #{cnn_bigru_forward.1} parent=0 // pred_check_branch
    %42 = sbr.rel (0) target = $region37
  $region36: #{cnn_bigru_forward.1} parent=0 // pred_region
    _
  $region37: #{cnn_bigru_forward.1} parent=0 // pred_fallthru
    _
  // Predicated region
  $region38: #{cnn_bigru_forward.1} parent=0 // pred_check
    _
  $region39: #{cnn_bigru_forward.1} parent=0 // pred_check_branch
    %44 = sbr.rel (0) target = $region41
  $region40: #{cnn_bigru_forward.1} parent=0 // pred_region
    _
  $region41: #{cnn_bigru_forward.1} parent=0 // pred_fallthru
    _
  // Predicated region
  $region42: #{cnn_bigru_forward.1} parent=0 // pred_check
    _
  $region43: #{cnn_bigru_forward.1} parent=0 // pred_check_branch
    %46 = sbr.rel (0) target = $region45
  $region44: #{cnn_bigru_forward.1} parent=0 // pred_region
    _
  $region45: #{cnn_bigru_forward.1} parent=0 // pred_fallthru
    _
  // Predicated region
  $region46: #{cnn_bigru_forward.1} parent=0 // pred_check
    _
  $region47: #{cnn_bigru_forward.1} parent=0 // pred_check_branch
    %48 = sbr.rel (0) target = $region49
  $region48: #{cnn_bigru_forward.1} parent=0 // pred_region
    _
  $region49: #{cnn_bigru_forward.1} parent=0 // pred_fallthru
    _
  // Predicated region
  $region50: #{cnn_bigru_forward.1} parent=0 // pred_check
    _
  $region51: #{cnn_bigru_forward.1} parent=0 // pred_check_branch
    %50 = sbr.rel (0) target = $region53
  $region52: #{cnn_bigru_forward.1} parent=0 // pred_region
    _
  $region53: #{cnn_bigru_forward.1} parent=0 // pred_fallthru
    _
  // Predicated region
  $region54: #{cnn_bigru_forward.1} parent=0 // pred_check
    _
  $region55: #{cnn_bigru_forward.1} parent=0 // pred_check_branch
    %52 = sbr.rel (0) target = $region57
  $region56: #{cnn_bigru_forward.1} parent=0 // pred_region
    _
  $region57: #{cnn_bigru_forward.1} parent=0 // pred_fallthru
    _
  // Predicated region
  $region58: #{cnn_bigru_forward.1} parent=0 // pred_check
    _
  $region59: #{cnn_bigru_forward.1} parent=0 // pred_check_branch
    %54 = sbr.rel (0) target = $region61
  $region60: #{cnn_bigru_forward.1} parent=0 // pred_region
    _
  $region61: #{cnn_bigru_forward.1} parent=0 // pred_fallthru
    _
  // Predicated region
  $region62: #{cnn_bigru_forward.1} parent=0 // pred_check
    _
  $region63: #{cnn_bigru_forward.1} parent=0 // pred_check_branch
    %56 = sbr.rel (0) target = $region65
  $region64: #{cnn_bigru_forward.1} parent=0 // pred_region
    _
  $region65: #{cnn_bigru_forward.1} parent=0 // pred_fallthru
    _
  // Predicated region
  $region66: #{cnn_bigru_forward.1} parent=0 // pred_check
    _
  $region67: #{cnn_bigru_forward.1} parent=0 // pred_check_branch
    %58 = sbr.rel (0) target = $region69
  $region68: #{cnn_bigru_forward.1} parent=0 // pred_region
    _
  $region69: #{cnn_bigru_forward.1} parent=0 // pred_fallthru
    _
  // Predicated region
  $region70: #{cnn_bigru_forward.1} parent=0 // pred_check
    _
  $region71: #{cnn_bigru_forward.1} parent=0 // pred_check_branch
    %60 = sbr.rel (0) target = $region73
  $region72: #{cnn_bigru_forward.1} parent=0 // pred_region
    _
  $region73: #{cnn_bigru_forward.1} parent=0 // pred_fallthru
    _
  // Predicated region
  $region74: #{cnn_bigru_forward.1} parent=0 // pred_check
    _
  $region75: #{cnn_bigru_forward.1} parent=0 // pred_check_branch
    %62 = sbr.rel (0) target = $region77
  $region76: #{cnn_bigru_forward.1} parent=0 // pred_region
    _
  $region77: #{cnn_bigru_forward.1} parent=0 // pred_fallthru
    _
  // Predicated region
  $region78: #{cnn_bigru_forward.1} parent=0 // pred_check
    _
  $region79: #{cnn_bigru_forward.1} parent=0 // pred_check_branch
    %64 = sbr.rel (0) target = $region81
  $region80: #{cnn_bigru_forward.1} parent=0 // pred_region
    _
  $region81: #{cnn_bigru_forward.1} parent=0 // pred_fallthru
    _
  %v66 = vld [vmem:[%s0] sm:$0xf]
  %v67 = vld [vmem:[%s0 + $0x4] sm:$0xf]
  %v68 = vld [vmem:[%s1] sm:$0xf]
  %v69 = vld [vmem:[%s1 + $0x4] sm:$0xf]
  %v70 = vld [vmem:[%s1 + $0x8] sm:$0xf]
  %v71 = vld [vmem:[%s1 + $0xc] sm:$0xf]
  %v72 = vld [vmem:[%s1 + $0x10] sm:$0xf]
  %v73 = vld [vmem:[%s1 + $0x14] sm:$0xf]
  %v74 = vld [vmem:[%s1 + $0x18] sm:$0xf]
  %v75 = vld [vmem:[%s1 + $0x1c] sm:$0xf]
  %v76 = vld [vmem:[%s1 + $0x20] sm:$0xf]
  %v77 = vld [vmem:[%s1 + $0x24] sm:$0xf]
  %v78 = vld [vmem:[%s1 + $0x28] sm:$0x3]
  %v79 = vld [vmem:[%s2] sm:$0x1]
  %v81 = vlaneseq
  %v82 = vshrl.u32 %v81, 7
  %v83 = vsub.s32 0, %v82
  %v84 = vrot.slane %v79, %v83
  %v88 = vunpack.c.l.b16 %v66
  %v89 = vunpack.c.l.b16 %v67
  %v90 = vpack.c.b16 %v89, %v88
  %v102 = vunpack.c.l.b16 %v68
  %v103 = vunpack.c.l.b16 %v69
  %v104 = vunpack.c.l.b16 %v70
  %v105 = vunpack.c.l.b16 %v71
  %v106 = vunpack.c.l.b16 %v72
  %v107 = vunpack.c.l.b16 %v73
  %v108 = vunpack.c.l.b16 %v74
  %v109 = vunpack.c.l.b16 %v75
  %v110 = vunpack.c.l.b16 %v76
  %v111 = vunpack.c.l.b16 %v77
  %v112 = vunpack.c.l.b16 %v78
  %v113 = vpack.c.b16 %v103, %v102
  %v114 = vpack.c.b16 %v105, %v104
  %v115 = vpack.c.b16 %v107, %v106
  %v116 = vpack.c.b16 %v109, %v108
  %v117 = vpack.c.b16 %v111, %v110
  %v118 = vpack.c.b16 %v112, %v112
  %vm124 = vcmask 687104
  %v126 = vsel %vm124, %v90, 0
  %vm128 = vcmask 1041408
  %v130 = vsel %vm128, %v118, 0
  %132 = vmatprep.subr.bf16.mxu0 0
  %133 = vmatpush1.bf16.msra.mxu0 %v113
  %134 = vmatprep.subr.bf16.mxu0 0
  %135 = vmatpush1.bf16.msra.mxu0 %v114
  %136 = vmatprep.subr.bf16.mxu0 0
  %137 = vmatpush1.bf16.msra.mxu0 %v115
  %138 = vmatprep.subr.bf16.mxu0 0
  %139 = vmatpush1.bf16.msra.mxu0 %v116
  %140 = vmatprep.subr.bf16.mxu0 0
  %141 = vmatpush1.bf16.msra.mxu0 %v117
  %142 = vmatprep.subr.bf16.mxu0 0
  %143 = vmatpush1.bf16.msra.mxu0 %v130
  %144 = vmatprep.subr.bf16.mxu0 0
  %145 = vmatpush1.bf16.msra.mxu0 0
  %146 = vmatprep.subr.bf16.mxu0 0
  %147 = vmatpush1.bf16.msra.mxu0 0
  %148 = vmatprep.subr.bf16.mxu0 0
  %149 = vmatpush1.bf16.msra.mxu0 0
  %150 = vmatprep.subr.bf16.mxu0 0
  %151 = vmatpush1.bf16.msra.mxu0 0
  %152 = vmatprep.subr.bf16.mxu0 0
  %153 = vmatpush1.bf16.msra.mxu0 0
  %154 = vmatprep.subr.bf16.mxu0 0
  %155 = vmatpush1.bf16.msra.mxu0 0
  %156 = vmatprep.subr.bf16.mxu0 0
  %157 = vmatpush1.bf16.msra.mxu0 0
  %158 = vmatprep.subr.bf16.mxu0 0
  %159 = vmatpush1.bf16.msra.mxu0 0
  %160 = vmatprep.subr.bf16.mxu0 0
  %161 = vmatpush1.bf16.msra.mxu0 0
  %162 = vmatprep.subr.bf16.mxu0 0
  %163 = vmatpush1.bf16.msra.mxu0 0
  %164 = vmatprep.mubr.bf16.mxu0 0
  %165 = vmatmul.mubr.bf16.gmra.mrb[0].mxu0 %v126
  %v166 = vpop.f32.mrb[0].mxu0
  %v167 = vadd.f32 %v84, %v166
  %v168 = vpop.f32.mrb[0].mxu0
  %v169 = vpop.f32.mrb[0].mxu0
  %v170 = vadd.f32 %v84, %v169
  %v171 = vpop.f32.mrb[0].mxu0
  %172 = vdwg.mxu0
  %v173 = vpack.c.bf16 %v170, %v167
  %v174 = vld [vmem:[%s3] sm:$0xf]
  %v175 = vld [vmem:[%s3 + $0x4] sm:$0x3]
  %v176 = vld [vmem:[%s4] sm:$0x1]
  %v178 = vlaneseq
  %v179 = vshrl.u32 %v178, 7
  %v180 = vsub.s32 0, %v179
  %v181 = vrot.slane %v176, %v180
  %v185 = vunpack.c.l.b16 %v174
  %v186 = vunpack.c.l.b16 %v175
  %v187 = vpack.c.b16 %v186, %v185
  %vm188 = vcmask 97280
  %v190 = vsel %vm188, %v173, 0
  %vm192 = vcmask 1045504
  %v194 = vsel %vm192, %v187, 0
  %196 = vmatprep.subr.bf16.mxu0 0
  %197 = vmatpush1.bf16.msra.mxu0 %v194
  %198 = vmatprep.subr.bf16.mxu0 0
  %199 = vmatpush1.bf16.msra.mxu0 0
  %200 = vmatprep.subr.bf16.mxu0 0
  %201 = vmatpush1.bf16.msra.mxu0 0
  %202 = vmatprep.subr.bf16.mxu0 0
  %203 = vmatpush1.bf16.msra.mxu0 0
  %204 = vmatprep.subr.bf16.mxu0 0
  %205 = vmatpush1.bf16.msra.mxu0 0
  %206 = vmatprep.subr.bf16.mxu0 0
  %207 = vmatpush1.bf16.msra.mxu0 0
  %208 = vmatprep.subr.bf16.mxu0 0
  %209 = vmatpush1.bf16.msra.mxu0 0
  %210 = vmatprep.subr.bf16.mxu0 0
  %211 = vmatpush1.bf16.msra.mxu0 0
  %212 = vmatprep.subr.bf16.mxu0 0
  %213 = vmatpush1.bf16.msra.mxu0 0
  %214 = vmatprep.subr.bf16.mxu0 0
  %215 = vmatpush1.bf16.msra.mxu0 0
  %216 = vmatprep.subr.bf16.mxu0 0
  %217 = vmatpush1.bf16.msra.mxu0 0
  %218 = vmatprep.subr.bf16.mxu0 0
  %219 = vmatpush1.bf16.msra.mxu0 0
  %220 = vmatprep.subr.bf16.mxu0 0
  %221 = vmatpush1.bf16.msra.mxu0 0
  %222 = vmatprep.subr.bf16.mxu0 0
  %223 = vmatpush1.bf16.msra.mxu0 0
  %224 = vmatprep.subr.bf16.mxu0 0
  %225 = vmatpush1.bf16.msra.mxu0 0
  %226 = vmatprep.subr.bf16.mxu0 0
  %227 = vmatpush1.bf16.msra.mxu0 0
  %228 = vmatprep.mubr.bf16.mxu0 0
  %229 = vmatmul.mubr.bf16.gmra.mrb[0].mxu0 %v190
  %v230 = vpop.f32.mrb[0].mxu0
  %v231 = vadd.f32 %v181, %v230
  %v232 = vpop.f32.mrb[0].mxu0
  %v233 = vpop.f32.mrb[0].mxu0
  %v234 = vadd.f32 %v181, %v233
  %v235 = vpop.f32.mrb[0].mxu0
  %236 = vdwg.mxu0
  %v237 = vld [vmem:[%s5] sm:$0x1]
  %v238 = vld [vmem:[%s6] sm:$0x1]
  %vm239 = vcmask 261120
  %v240 = vsel %vm239, %v231, 0.0
  %241 = vadd.xlane.f32.xlu0 %v240
  %v242 = vpop.xlane.xlu0 %241
  %v243 = vsel %vm239, %v234, 0.0
  %244 = vadd.xlane.f32.xlu0 %v243
  %v245 = vpop.xlane.xlu0 %244
  %v246 = vrcp.pop 32.0
  %v247 = vmul.f32 %v242, %v246
  %v248 = vmul.f32 %v245, %v246
  %v249 = vsub.f32 %v231, %v247
  %v250 = vsub.f32 %v234, %v248
  %v251 = vmul.f32 %v249, %v249
  %v252 = vmul.f32 %v250, %v250
  %v253 = vsel %vm239, %v251, 0.0
  %254 = vadd.xlane.f32.xlu0 %v253
  %v255 = vpop.xlane.xlu0 %254
  %v256 = vsel %vm239, %v252, 0.0
  %257 = vadd.xlane.f32.xlu0 %v256
  %v258 = vpop.xlane.xlu0 %257
  %v259 = vmul.f32 %v255, %v246
  %v260 = vmul.f32 %v258, %v246
  %v261 = vadd.f32 %v259, 1e-05
  %v262 = vadd.f32 %v260, 1e-05
  %v263 = vrsqrt.pop %v261
  %v264 = vrsqrt.pop %v262
  %v265 = vmul.f32 %v249, %v263
  %v266 = vmul.f32 %v250, %v264
  %v268 = vlaneseq
  %v269 = vshrl.u32 %v268, 7
  %v270 = vsub.s32 0, %v269
  %v271 = vrot.slane %v237, %v270
  %v273 = vmul.f32 %v265, %v271
  %v274 = vmul.f32 %v266, %v271
  %v276 = vlaneseq
  %v277 = vshrl.u32 %v276, 7
  %v278 = vsub.s32 0, %v277
  %v279 = vrot.slane %v238, %v278
  %v281 = vadd.f32 %v273, %v279
  %v282 = vadd.f32 %v274, %v279
  %v283 = vld [vmem:[%s7] sm:$0x1]
  %v284 = vld [vmem:[%s8] sm:$0x1]
  %287 = vrot.lane.b32.xlu0 %v231, 96
  %v288 = vpop.permute.xlu0 %287
  %289 = vrot.lane.b32.xlu0 %v234, 96
  %v290 = vpop.permute.xlu0 %289
  %vm293 = vcmask 130048
  %v294 = vsel %vm293, %v288, 0.0
  %295 = vadd.xlane.f32.xlu0 %v294
  %v296 = vpop.xlane.xlu0 %295
  %v297 = vsel %vm293, %v290, 0.0
  %298 = vadd.xlane.f32.xlu0 %v297
  %v299 = vpop.xlane.xlu0 %298
  %v300 = vrcp.pop 16.0
  %v301 = vmul.f32 %v296, %v300
  %v302 = vmul.f32 %v299, %v300
  %v303 = vsub.f32 %v231, %v301
  %v304 = vsub.f32 %v234, %v302
  %v305 = vmul.f32 %v303, %v303
  %v306 = vmul.f32 %v304, %v304
  %309 = vrot.lane.b32.xlu0 %v305, 96
  %v310 = vpop.permute.xlu0 %309
  %311 = vrot.lane.b32.xlu0 %v306, 96
  %v312 = vpop.permute.xlu0 %311
  %v315 = vsel %vm293, %v310, 0.0
  %316 = vadd.xlane.f32.xlu0 %v315
  %v317 = vpop.xlane.xlu0 %316
  %v318 = vsel %vm293, %v312, 0.0
  %319 = vadd.xlane.f32.xlu0 %v318
  %v320 = vpop.xlane.xlu0 %319
  %v321 = vmul.f32 %v317, %v300
  %v322 = vmul.f32 %v320, %v300
  %v323 = vadd.f32 %v321, 1e-05
  %v324 = vadd.f32 %v322, 1e-05
  %v325 = vrsqrt.pop %v323
  %v326 = vrsqrt.pop %v324
  %v327 = vmul.f32 %v303, %v325
  %v328 = vmul.f32 %v304, %v326
  %v330 = vlaneseq
  %v331 = vshrl.u32 %v330, 7
  %v332 = vsub.s32 0, %v331
  %v333 = vrot.slane %v283, %v332
  %334 = vrot.lane.b32.xlu0 %v333, 32
  %v335 = vpop.permute.xlu0 %334
  %v337 = vmul.f32 %v327, %v335
  %v338 = vmul.f32 %v328, %v335
  %v340 = vlaneseq
  %v341 = vshrl.u32 %v340, 7
  %v342 = vsub.s32 0, %v341
  %v343 = vrot.slane %v284, %v342
  %344 = vrot.lane.b32.xlu0 %v343, 32
  %v345 = vpop.permute.xlu0 %344
  %v347 = vadd.f32 %v337, %v345
  %v348 = vadd.f32 %v338, %v345
  %v349 = vsel %vm239, %v281, %v347
  %v350 = vsel %vm239, %v282, %v348
  %v351 = vld [vmem:[%s17] sm:$0xff]
  %v352 = vld [vmem:[%s17 + $0x8] sm:$0xff]
  %v353 = vld [vmem:[%s17 + $0x10] sm:$0xff]
  %v354 = vld [vmem:[%s17 + $0x18] sm:$0xff]
  %v356 = vsel %vm293, %v351, 0
  %v359 = vsel %vm293, %v352, 0
  %v362 = vsel %vm293, %v353, 0
  %v365 = vsel %vm293, %v354, 0
  %367 = vmatprep.subr.mxu0 0.0
  %368 = vmatpush1.msra.mxu0 %v349
  %369 = vmatprep.subr.mxu0 0.0
  %370 = vmatpush1.msra.mxu0 %v350
  %371 = vmatprep.subr.mxu0 0.0
  %372 = vmatpush1.msra.mxu0 0.0
  %373 = vmatprep.subr.mxu0 0.0
  %374 = vmatpush1.msra.mxu0 0.0
  %375 = vmatprep.subr.mxu0 0.0
  %376 = vmatpush1.msra.mxu0 0.0
  %377 = vmatprep.subr.mxu0 0.0
  %378 = vmatpush1.msra.mxu0 0.0
  %379 = vmatprep.subr.mxu0 0.0
  %380 = vmatpush1.msra.mxu0 0.0
  %381 = vmatprep.subr.mxu0 0.0
  %382 = vmatpush1.msra.mxu0 0.0
  %383 = vmatprep.subr.mxu0 0.0
  %384 = vmatpush1.msra.mxu0 0.0
  %385 = vmatprep.subr.mxu0 0.0
  %386 = vmatpush1.msra.mxu0 0.0
  %387 = vmatprep.subr.mxu0 0.0
  %388 = vmatpush1.msra.mxu0 0.0
  %389 = vmatprep.subr.mxu0 0.0
  %390 = vmatpush1.msra.mxu0 0.0
  %391 = vmatprep.subr.mxu0 0.0
  %392 = vmatpush1.msra.mxu0 0.0
  %393 = vmatprep.subr.mxu0 0.0
  %394 = vmatpush1.msra.mxu0 0.0
  %395 = vmatprep.subr.mxu0 0.0
  %396 = vmatpush1.msra.mxu0 0.0
  %397 = vmatprep.subr.mxu0 0.0
  %398 = vmatpush1.msra.mxu0 0.0
  %399 = vmatprep.subr.mxu0 0.0
  %400 = vmatpush1.msra.mxu0 0.0
  %401 = vmatprep.subr.mxu0 0.0
  %402 = vmatpush1.msra.mxu0 0.0
  %403 = vmatprep.subr.mxu0 0.0
  %404 = vmatpush1.msra.mxu0 0.0
  %405 = vmatprep.subr.mxu0 0.0
  %406 = vmatpush1.msra.mxu0 0.0
  %407 = vmatprep.subr.mxu0 0.0
  %408 = vmatpush1.msra.mxu0 0.0
  %409 = vmatprep.subr.mxu0 0.0
  %410 = vmatpush1.msra.mxu0 0.0
  %411 = vmatprep.subr.mxu0 0.0
  %412 = vmatpush1.msra.mxu0 0.0
  %413 = vmatprep.subr.mxu0 0.0
  %414 = vmatpush1.msra.mxu0 0.0
  %415 = vmatprep.subr.mxu0 0.0
  %416 = vmatpush1.msra.mxu0 0.0
  %417 = vmatprep.subr.mxu0 0.0
  %418 = vmatpush1.msra.mxu0 0.0
  %419 = vmatprep.subr.mxu0 0.0
  %420 = vmatpush1.msra.mxu0 0.0
  %421 = vmatprep.subr.mxu0 0.0
  %422 = vmatpush1.msra.mxu0 0.0
  %423 = vmatprep.subr.mxu0 0.0
  %424 = vmatpush1.msra.mxu0 0.0
  %425 = vmatprep.subr.mxu0 0.0
  %426 = vmatpush1.msra.mxu0 0.0
  %427 = vmatprep.subr.mxu0 0.0
  %428 = vmatpush1.msra.mxu0 0.0
  %429 = vmatprep.subr.mxu0 0.0
  %430 = vmatpush1.msra.mxu0 0.0
  %431 = vmatprep.mubr.f32.mxu0 0.0
  %432 = vmatmul.mubr.f32.gmra.mrb[0].mxu0 %v356
  %v433 = vpop.f32.mrb[0].mxu0
  %v434 = vadd.f32 0.0, %v433
  %v435 = vpop.f32.mrb[0].mxu0
  %436 = vmatprep.mubr.f32.mxu0 0.0
  %437 = vmatmul.mubr.f32.gmra.mrb[0].mxu0 %v359
  %v438 = vpop.f32.mrb[0].mxu0
  %v439 = vadd.f32 0.0, %v438
  %v440 = vpop.f32.mrb[0].mxu0
  %441 = vmatprep.mubr.f32.mxu0 0.0
  %442 = vmatmul.mubr.f32.gmra.mrb[0].mxu0 %v362
  %v443 = vpop.f32.mrb[0].mxu0
  %v444 = vadd.f32 0.0, %v443
  %v445 = vpop.f32.mrb[0].mxu0
  %446 = vmatprep.mubr.f32.mxu0 0.0
  %447 = vmatmul.mubr.f32.gmra.mrb[0].mxu0 %v365
  %v448 = vpop.f32.mrb[0].mxu0
  %v449 = vadd.f32 0.0, %v448
  %v450 = vpop.f32.mrb[0].mxu0
  %451 = vdwg.mxu0
  %vm452 = vcmask 392192
  %453 = vst.msk [vmem:[#allocation2] sm:$0xff] %vm452, %v434
  %454 = vst.msk [vmem:[#allocation2 + $0x8] sm:$0xff] %vm452, %v439
  %455 = vst.msk [vmem:[#allocation2 + $0x10] sm:$0xff] %vm452, %v444
  %456 = vst.msk [vmem:[#allocation2 + $0x18] sm:$0xff] %vm452, %v449
  %v457 = vld [vmem:[%s9] sm:$0xff]
  %v458 = vld [vmem:[%s9 + $0x8] sm:$0xff]
  %v459 = vld [vmem:[%s10] sm:$0x1]
  %v460 = vld [vmem:[%s11] sm:$0x1]
  %v461 = vld [vmem:[%s12] sm:$0x1]
  %v462 = vld [vmem:[%s13] sm:$0x1]
  %v463 = vld [vmem:[%s14] sm:$0x1]
  %v464 = vld [vmem:[#allocation2] sm:$0xf]
  %v466 = vlaneseq
  %v467 = vshrl.u32 %v466, 7
  %v468 = vsub.s32 0, %v467
  %v469 = vrot.slane %v459, %v468
  %v472 = vsel %vm293, 0.0, 0
  %474 = vmatprep.subr.mxu0 0.0
  %475 = vmatpush1.msra.mxu0 %v457
  %476 = vmatprep.subr.mxu0 0.0
  %477 = vmatpush1.msra.mxu0 %v458
  %478 = vmatprep.subr.mxu0 0.0
  %479 = vmatpush1.msra.mxu0 0.0
  %480 = vmatprep.subr.mxu0 0.0
  %481 = vmatpush1.msra.mxu0 0.0
  %482 = vmatprep.subr.mxu0 0.0
  %483 = vmatpush1.msra.mxu0 0.0
  %484 = vmatprep.subr.mxu0 0.0
  %485 = vmatpush1.msra.mxu0 0.0
  %486 = vmatprep.subr.mxu0 0.0
  %487 = vmatpush1.msra.mxu0 0.0
  %488 = vmatprep.subr.mxu0 0.0
  %489 = vmatpush1.msra.mxu0 0.0
  %490 = vmatprep.subr.mxu0 0.0
  %491 = vmatpush1.msra.mxu0 0.0
  %492 = vmatprep.subr.mxu0 0.0
  %493 = vmatpush1.msra.mxu0 0.0
  %494 = vmatprep.subr.mxu0 0.0
  %495 = vmatpush1.msra.mxu0 0.0
  %496 = vmatprep.subr.mxu0 0.0
  %497 = vmatpush1.msra.mxu0 0.0
  %498 = vmatprep.subr.mxu0 0.0
  %499 = vmatpush1.msra.mxu0 0.0
  %500 = vmatprep.subr.mxu0 0.0
  %501 = vmatpush1.msra.mxu0 0.0
  %502 = vmatprep.subr.mxu0 0.0
  %503 = vmatpush1.msra.mxu0 0.0
  %504 = vmatprep.subr.mxu0 0.0
  %505 = vmatpush1.msra.mxu0 0.0
  %506 = vmatprep.subr.mxu0 0.0
  %507 = vmatpush1.msra.mxu0 0.0
  %508 = vmatprep.subr.mxu0 0.0
  %509 = vmatpush1.msra.mxu0 0.0
  %510 = vmatprep.subr.mxu0 0.0
  %511 = vmatpush1.msra.mxu0 0.0
  %512 = vmatprep.subr.mxu0 0.0
  %513 = vmatpush1.msra.mxu0 0.0
  %514 = vmatprep.subr.mxu0 0.0
  %515 = vmatpush1.msra.mxu0 0.0
  %516 = vmatprep.subr.mxu0 0.0
  %517 = vmatpush1.msra.mxu0 0.0
  %518 = vmatprep.subr.mxu0 0.0
  %519 = vmatpush1.msra.mxu0 0.0
  %520 = vmatprep.subr.mxu0 0.0
  %521 = vmatpush1.msra.mxu0 0.0
  %522 = vmatprep.subr.mxu0 0.0
  %523 = vmatpush1.msra.mxu0 0.0
  %524 = vmatprep.subr.mxu0 0.0
  %525 = vmatpush1.msra.mxu0 0.0
  %526 = vmatprep.subr.mxu0 0.0
  %527 = vmatpush1.msra.mxu0 0.0
  %528 = vmatprep.subr.mxu0 0.0
  %529 = vmatpush1.msra.mxu0 0.0
  %530 = vmatprep.subr.mxu0 0.0
  %531 = vmatpush1.msra.mxu0 0.0
  %532 = vmatprep.subr.mxu0 0.0
  %533 = vmatpush1.msra.mxu0 0.0
  %534 = vmatprep.subr.mxu0 0.0
  %535 = vmatpush1.msra.mxu0 0.0
  %536 = vmatprep.subr.mxu0 0.0
  %537 = vmatpush1.msra.mxu0 0.0
  %538 = vmatprep.mubr.f32.mxu0 0.0
  %539 = vmatmul.mubr.f32.gmra.mrb[0].mxu0 %v472
  %v540 = vpop.f32.mrb[0].mxu0
  %v541 = vadd.f32 %v469, %v540
  %v542 = vpop.f32.mrb[0].mxu0
  %543 = vdwg.mxu0
  %vm544 = vcmask 257024
  %v545 = vsel %vm544, %v541, 0.0
  %546 = vadd.xlane.f32.xlu0 %v545
  %v547 = vpop.xlane.xlu0 %546
  %v548 = vmul.f32 %v547, %v246
  %v549 = vsub.f32 %v541, %v548
  %v550 = vmul.f32 %v549, %v549
  %v551 = vsel %vm544, %v550, 0.0
  %552 = vadd.xlane.f32.xlu0 %v551
  %v553 = vpop.xlane.xlu0 %552
  %v554 = vmul.f32 %v553, %v246
  %v555 = vadd.f32 %v554, 1e-05
  %v556 = vrsqrt.pop %v555
  %v557 = vmul.f32 %v549, %v556
  %v559 = vlaneseq
  %v560 = vshrl.u32 %v559, 7
  %v561 = vsub.s32 0, %v560
  %v562 = vrot.slane %v460, %v561
  %v564 = vmul.f32 %v557, %v562
  %v566 = vlaneseq
  %v567 = vshrl.u32 %v566, 7
  %v568 = vsub.s32 0, %v567
  %v569 = vrot.slane %v461, %v568
  %v571 = vadd.f32 %v564, %v569
  %v572 = vadd.f32 %v464, %v571
  %v573 = vxor.u32 %v572, 2147483648
  %v574 = vmul.f32 %v573, 1.442695
  %v575 = vpow.pop %v574
  %v576 = vadd.f32 %v575, 1.0
  %v577 = vrcp.pop %v576
  %v578 = vmul.f32 1.0, %v577
  %580 = vrot.lane.b32.xlu0 %v541, 96
  %v581 = vpop.permute.xlu0 %580
  %vm583 = vcmask 125952
  %v584 = vsel %vm583, %v581, 0.0
  %585 = vadd.xlane.f32.xlu0 %v584
  %v586 = vpop.xlane.xlu0 %585
  %v587 = vmul.f32 %v586, %v300
  %v588 = vsub.f32 %v541, %v587
  %v589 = vmul.f32 %v588, %v588
  %591 = vrot.lane.b32.xlu0 %v589, 96
  %v592 = vpop.permute.xlu0 %591
  %v594 = vsel %vm583, %v592, 0.0
  %595 = vadd.xlane.f32.xlu0 %v594
  %v596 = vpop.xlane.xlu0 %595
  %v597 = vmul.f32 %v596, %v300
  %v598 = vadd.f32 %v597, 1e-05
  %v599 = vrsqrt.pop %v598
  %v600 = vmul.f32 %v588, %v599
  %v602 = vlaneseq
  %v603 = vshrl.u32 %v602, 7
  %v604 = vsub.s32 0, %v603
  %v605 = vrot.slane %v462, %v604
  %606 = vrot.lane.b32.xlu0 %v605, 32
  %v607 = vpop.permute.xlu0 %606
  %v609 = vmul.f32 %v600, %v607
  %v611 = vlaneseq
  %v612 = vshrl.u32 %v611, 7
  %v613 = vsub.s32 0, %v612
  %v614 = vrot.slane %v463, %v613
  %615 = vrot.lane.b32.xlu0 %v614, 32
  %v616 = vpop.permute.xlu0 %615
  %v618 = vadd.f32 %v609, %v616
  %620 = vrot.lane.b32.xlu0 %v618, 96
  %v621 = vpop.permute.xlu0 %620
  %v623 = vmul.f32 %v578, %v621
  %625 = vrot.lane.b32.xlu0 %v623, 32
  %v626 = vpop.permute.xlu0 %625
  %v628 = vadd.f32 %v464, %v626
  %v629 = vtanh.pop %v628
  %v630 = vsub.f32 1.0, %v578
  %632 = vrot.lane.b32.xlu0 %v629, 112
  %v633 = vpop.permute.xlu0 %632
  %v635 = vmul.f32 %v630, %v633
  %v636 = vmul.f32 %v578, 0.0
  %v637 = vadd.f32 %v635, %v636
  %639 = vrot.lane.b32.xlu0 %v637, 112
  %v640 = vpop.permute.xlu0 %639
  %642 = vst.msk [vmem:[#allocation3] sm:$0xf] %vm583, %v640
  %v643 = vld [vmem:[#allocation2 + $0x4] sm:$0xf]
  %v644 = vsel %vm293, %v640, 0
  %646 = vmatprep.subr.mxu0 0.0
  %647 = vmatpush1.msra.mxu0 %v457
  %648 = vmatprep.subr.mxu0 0.0
  %649 = vmatpush1.msra.mxu0 %v458
  %650 = vmatprep.subr.mxu0 0.0
  %651 = vmatpush1.msra.mxu0 0.0
  %652 = vmatprep.subr.mxu0 0.0
  %653 = vmatpush1.msra.mxu0 0.0
  %654 = vmatprep.subr.mxu0 0.0
  %655 = vmatpush1.msra.mxu0 0.0
  %656 = vmatprep.subr.mxu0 0.0
  %657 = vmatpush1.msra.mxu0 0.0
  %658 = vmatprep.subr.mxu0 0.0
  %659 = vmatpush1.msra.mxu0 0.0
  %660 = vmatprep.subr.mxu0 0.0
  %661 = vmatpush1.msra.mxu0 0.0
  %662 = vmatprep.subr.mxu0 0.0
  %663 = vmatpush1.msra.mxu0 0.0
  %664 = vmatprep.subr.mxu0 0.0
  %665 = vmatpush1.msra.mxu0 0.0
  %666 = vmatprep.subr.mxu0 0.0
  %667 = vmatpush1.msra.mxu0 0.0
  %668 = vmatprep.subr.mxu0 0.0
  %669 = vmatpush1.msra.mxu0 0.0
  %670 = vmatprep.subr.mxu0 0.0
  %671 = vmatpush1.msra.mxu0 0.0
  %672 = vmatprep.subr.mxu0 0.0
  %673 = vmatpush1.msra.mxu0 0.0
  %674 = vmatprep.subr.mxu0 0.0
  %675 = vmatpush1.msra.mxu0 0.0
  %676 = vmatprep.subr.mxu0 0.0
  %677 = vmatpush1.msra.mxu0 0.0
  %678 = vmatprep.subr.mxu0 0.0
  %679 = vmatpush1.msra.mxu0 0.0
  %680 = vmatprep.subr.mxu0 0.0
  %681 = vmatpush1.msra.mxu0 0.0
  %682 = vmatprep.subr.mxu0 0.0
  %683 = vmatpush1.msra.mxu0 0.0
  %684 = vmatprep.subr.mxu0 0.0
  %685 = vmatpush1.msra.mxu0 0.0
  %686 = vmatprep.subr.mxu0 0.0
  %687 = vmatpush1.msra.mxu0 0.0
  %688 = vmatprep.subr.mxu0 0.0
  %689 = vmatpush1.msra.mxu0 0.0
  %690 = vmatprep.subr.mxu0 0.0
  %691 = vmatpush1.msra.mxu0 0.0
  %692 = vmatprep.subr.mxu0 0.0
  %693 = vmatpush1.msra.mxu0 0.0
  %694 = vmatprep.subr.mxu0 0.0
  %695 = vmatpush1.msra.mxu0 0.0
  %696 = vmatprep.subr.mxu0 0.0
  %697 = vmatpush1.msra.mxu0 0.0
  %698 = vmatprep.subr.mxu0 0.0
  %699 = vmatpush1.msra.mxu0 0.0
  %700 = vmatprep.subr.mxu0 0.0
  %701 = vmatpush1.msra.mxu0 0.0
  %702 = vmatprep.subr.mxu0 0.0
  %703 = vmatpush1.msra.mxu0 0.0
  %704 = vmatprep.subr.mxu0 0.0
  %705 = vmatpush1.msra.mxu0 0.0
  %706 = vmatprep.subr.mxu0 0.0
  %707 = vmatpush1.msra.mxu0 0.0
  %708 = vmatprep.subr.mxu0 0.0
  %709 = vmatpush1.msra.mxu0 0.0
  %710 = vmatprep.mubr.f32.mxu0 0.0
  %711 = vmatmul.mubr.f32.gmra.mrb[0].mxu0 %v644
  %v712 = vpop.f32.mrb[0].mxu0
  %v713 = vadd.f32 %v469, %v712
  %v714 = vpop.f32.mrb[0].mxu0
  %715 = vdwg.mxu0
  %v716 = vsel %vm544, %v713, 0.0
  %717 = vadd.xlane.f32.xlu0 %v716
  %v718 = vpop.xlane.xlu0 %717
  %v719 = vmul.f32 %v718, %v246
  %v720 = vsub.f32 %v713, %v719
  %v721 = vmul.f32 %v720, %v720
  %v722 = vsel %vm544, %v721, 0.0
  %723 = vadd.xlane.f32.xlu0 %v722
  %v724 = vpop.xlane.xlu0 %723
  %v725 = vmul.f32 %v724, %v246
  %v726 = vadd.f32 %v725, 1e-05
  %v727 = vrsqrt.pop %v726
  %v728 = vmul.f32 %v720, %v727
  %v729 = vmul.f32 %v728, %v562
  %v730 = vadd.f32 %v729, %v569
  %v731 = vadd.f32 %v643, %v730
  %v732 = vxor.u32 %v731, 2147483648
  %v733 = vmul.f32 %v732, 1.442695
  %v734 = vpow.pop %v733
  %v735 = vadd.f32 %v734, 1.0
  %v736 = vrcp.pop %v735
  %v737 = vmul.f32 1.0, %v736
  %739 = vrot.lane.b32.xlu0 %v713, 96
  %v740 = vpop.permute.xlu0 %739
  %v742 = vsel %vm583, %v740, 0.0
  %743 = vadd.xlane.f32.xlu0 %v742
  %v744 = vpop.xlane.xlu0 %743
  %v745 = vmul.f32 %v744, %v300
  %v746 = vsub.f32 %v713, %v745
  %v747 = vmul.f32 %v746, %v746
  %749 = vrot.lane.b32.xlu0 %v747, 96
  %v750 = vpop.permute.xlu0 %749
  %v752 = vsel %vm583, %v750, 0.0
  %753 = vadd.xlane.f32.xlu0 %v752
  %v754 = vpop.xlane.xlu0 %753
  %v755 = vmul.f32 %v754, %v300
  %v756 = vadd.f32 %v755, 1e-05
  %v757 = vrsqrt.pop %v756
  %v758 = vmul.f32 %v746, %v757
  %v759 = vmul.f32 %v758, %v607
  %v760 = vadd.f32 %v759, %v616
  %762 = vrot.lane.b32.xlu0 %v760, 96
  %v763 = vpop.permute.xlu0 %762
  %v765 = vmul.f32 %v737, %v763
  %767 = vrot.lane.b32.xlu0 %v765, 32
  %v768 = vpop.permute.xlu0 %767
  %v770 = vadd.f32 %v643, %v768
  %v771 = vtanh.pop %v770
  %v772 = vsub.f32 1.0, %v737
  %774 = vrot.lane.b32.xlu0 %v771, 112
  %v775 = vpop.permute.xlu0 %774
  %v777 = vmul.f32 %v772, %v775
  %v778 = vmul.f32 %v737, %v637
  %v779 = vadd.f32 %v777, %v778
  %781 = vrot.lane.b32.xlu0 %v779, 112
  %v782 = vpop.permute.xlu0 %781
  %784 = vst.msk [vmem:[#allocation3 + $0x4] sm:$0xf] %vm583, %v782
  %v785 = vld [vmem:[#allocation2 + $0x8] sm:$0xf]
  %v786 = vsel %vm293, %v782, 0
  %788 = vmatprep.subr.mxu0 0.0
  %789 = vmatpush1.msra.mxu0 %v457
  %790 = vmatprep.subr.mxu0 0.0
  %791 = vmatpush1.msra.mxu0 %v458
  %792 = vmatprep.subr.mxu0 0.0
  %793 = vmatpush1.msra.mxu0 0.0
  %794 = vmatprep.subr.mxu0 0.0
  %795 = vmatpush1.msra.mxu0 0.0
  %796 = vmatprep.subr.mxu0 0.0
  %797 = vmatpush1.msra.mxu0 0.0
  %798 = vmatprep.subr.mxu0 0.0
  %799 = vmatpush1.msra.mxu0 0.0
  %800 = vmatprep.subr.mxu0 0.0
  %801 = vmatpush1.msra.mxu0 0.0
  %802 = vmatprep.subr.mxu0 0.0
  %803 = vmatpush1.msra.mxu0 0.0
  %804 = vmatprep.subr.mxu0 0.0
  %805 = vmatpush1.msra.mxu0 0.0
  %806 = vmatprep.subr.mxu0 0.0
  %807 = vmatpush1.msra.mxu0 0.0
  %808 = vmatprep.subr.mxu0 0.0
  %809 = vmatpush1.msra.mxu0 0.0
  %810 = vmatprep.subr.mxu0 0.0
  %811 = vmatpush1.msra.mxu0 0.0
  %812 = vmatprep.subr.mxu0 0.0
  %813 = vmatpush1.msra.mxu0 0.0
  %814 = vmatprep.subr.mxu0 0.0
  %815 = vmatpush1.msra.mxu0 0.0
  %816 = vmatprep.subr.mxu0 0.0
  %817 = vmatpush1.msra.mxu0 0.0
  %818 = vmatprep.subr.mxu0 0.0
  %819 = vmatpush1.msra.mxu0 0.0
  %820 = vmatprep.subr.mxu0 0.0
  %821 = vmatpush1.msra.mxu0 0.0
  %822 = vmatprep.subr.mxu0 0.0
  %823 = vmatpush1.msra.mxu0 0.0
  %824 = vmatprep.subr.mxu0 0.0
  %825 = vmatpush1.msra.mxu0 0.0
  %826 = vmatprep.subr.mxu0 0.0
  %827 = vmatpush1.msra.mxu0 0.0
  %828 = vmatprep.subr.mxu0 0.0
  %829 = vmatpush1.msra.mxu0 0.0
  %830 = vmatprep.subr.mxu0 0.0
  %831 = vmatpush1.msra.mxu0 0.0
  %832 = vmatprep.subr.mxu0 0.0
  %833 = vmatpush1.msra.mxu0 0.0
  %834 = vmatprep.subr.mxu0 0.0
  %835 = vmatpush1.msra.mxu0 0.0
  %836 = vmatprep.subr.mxu0 0.0
  %837 = vmatpush1.msra.mxu0 0.0
  %838 = vmatprep.subr.mxu0 0.0
  %839 = vmatpush1.msra.mxu0 0.0
  %840 = vmatprep.subr.mxu0 0.0
  %841 = vmatpush1.msra.mxu0 0.0
  %842 = vmatprep.subr.mxu0 0.0
  %843 = vmatpush1.msra.mxu0 0.0
  %844 = vmatprep.subr.mxu0 0.0
  %845 = vmatpush1.msra.mxu0 0.0
  %846 = vmatprep.subr.mxu0 0.0
  %847 = vmatpush1.msra.mxu0 0.0
  %848 = vmatprep.subr.mxu0 0.0
  %849 = vmatpush1.msra.mxu0 0.0
  %850 = vmatprep.subr.mxu0 0.0
  %851 = vmatpush1.msra.mxu0 0.0
  %852 = vmatprep.mubr.f32.mxu0 0.0
  %853 = vmatmul.mubr.f32.gmra.mrb[0].mxu0 %v786
  %v854 = vpop.f32.mrb[0].mxu0
  %v855 = vadd.f32 %v469, %v854
  %v856 = vpop.f32.mrb[0].mxu0
  %857 = vdwg.mxu0
  %v858 = vsel %vm544, %v855, 0.0
  %859 = vadd.xlane.f32.xlu0 %v858
  %v860 = vpop.xlane.xlu0 %859
  %v861 = vmul.f32 %v860, %v246
  %v862 = vsub.f32 %v855, %v861
  %v863 = vmul.f32 %v862, %v862
  %v864 = vsel %vm544, %v863, 0.0
  %865 = vadd.xlane.f32.xlu0 %v864
  %v866 = vpop.xlane.xlu0 %865
  %v867 = vmul.f32 %v866, %v246
  %v868 = vadd.f32 %v867, 1e-05
  %v869 = vrsqrt.pop %v868
  %v870 = vmul.f32 %v862, %v869
  %v871 = vmul.f32 %v870, %v562
  %v872 = vadd.f32 %v871, %v569
  %v873 = vadd.f32 %v785, %v872
  %v874 = vxor.u32 %v873, 2147483648
  %v875 = vmul.f32 %v874, 1.442695
  %v876 = vpow.pop %v875
  %v877 = vadd.f32 %v876, 1.0
  %v878 = vrcp.pop %v877
  %v879 = vmul.f32 1.0, %v878
  %881 = vrot.lane.b32.xlu0 %v855, 96
  %v882 = vpop.permute.xlu0 %881
  %v884 = vsel %vm583, %v882, 0.0
  %885 = vadd.xlane.f32.xlu0 %v884
  %v886 = vpop.xlane.xlu0 %885
  %v887 = vmul.f32 %v886, %v300
  %v888 = vsub.f32 %v855, %v887
  %v889 = vmul.f32 %v888, %v888
  %891 = vrot.lane.b32.xlu0 %v889, 96
  %v892 = vpop.permute.xlu0 %891
  %v894 = vsel %vm583, %v892, 0.0
  %895 = vadd.xlane.f32.xlu0 %v894
  %v896 = vpop.xlane.xlu0 %895
  %v897 = vmul.f32 %v896, %v300
  %v898 = vadd.f32 %v897, 1e-05
  %v899 = vrsqrt.pop %v898
  %v900 = vmul.f32 %v888, %v899
  %v901 = vmul.f32 %v900, %v607
  %v902 = vadd.f32 %v901, %v616
  %904 = vrot.lane.b32.xlu0 %v902, 96
  %v905 = vpop.permute.xlu0 %904
  %v907 = vmul.f32 %v879, %v905
  %909 = vrot.lane.b32.xlu0 %v907, 32
  %v910 = vpop.permute.xlu0 %909
  %v912 = vadd.f32 %v785, %v910
  %v913 = vtanh.pop %v912
  %v914 = vsub.f32 1.0, %v879
  %916 = vrot.lane.b32.xlu0 %v913, 112
  %v917 = vpop.permute.xlu0 %916
  %v919 = vmul.f32 %v914, %v917
  %v920 = vmul.f32 %v879, %v779
  %v921 = vadd.f32 %v919, %v920
  %923 = vrot.lane.b32.xlu0 %v921, 112
  %v924 = vpop.permute.xlu0 %923
  %926 = vst.msk [vmem:[#allocation3 + $0x8] sm:$0xf] %vm583, %v924
  %v927 = vld [vmem:[#allocation2 + $0xc] sm:$0xf]
  %v928 = vsel %vm293, %v924, 0
  %930 = vmatprep.subr.mxu0 0.0
  %931 = vmatpush1.msra.mxu0 %v457
  %932 = vmatprep.subr.mxu0 0.0
  %933 = vmatpush1.msra.mxu0 %v458
  %934 = vmatprep.subr.mxu0 0.0
  %935 = vmatpush1.msra.mxu0 0.0
  %936 = vmatprep.subr.mxu0 0.0
  %937 = vmatpush1.msra.mxu0 0.0
  %938 = vmatprep.subr.mxu0 0.0
  %939 = vmatpush1.msra.mxu0 0.0
  %940 = vmatprep.subr.mxu0 0.0
  %941 = vmatpush1.msra.mxu0 0.0
  %942 = vmatprep.subr.mxu0 0.0
  %943 = vmatpush1.msra.mxu0 0.0
  %944 = vmatprep.subr.mxu0 0.0
  %945 = vmatpush1.msra.mxu0 0.0
  %946 = vmatprep.subr.mxu0 0.0
  %947 = vmatpush1.msra.mxu0 0.0
  %948 = vmatprep.subr.mxu0 0.0
  %949 = vmatpush1.msra.mxu0 0.0
  %950 = vmatprep.subr.mxu0 0.0
  %951 = vmatpush1.msra.mxu0 0.0
  %952 = vmatprep.subr.mxu0 0.0
  %953 = vmatpush1.msra.mxu0 0.0
  %954 = vmatprep.subr.mxu0 0.0
  %955 = vmatpush1.msra.mxu0 0.0
  %956 = vmatprep.subr.mxu0 0.0
  %957 = vmatpush1.msra.mxu0 0.0
  %958 = vmatprep.subr.mxu0 0.0
  %959 = vmatpush1.msra.mxu0 0.0
  %960 = vmatprep.subr.mxu0 0.0
  %961 = vmatpush1.msra.mxu0 0.0
  %962 = vmatprep.subr.mxu0 0.0
  %963 = vmatpush1.msra.mxu0 0.0
  %964 = vmatprep.subr.mxu0 0.0
  %965 = vmatpush1.msra.mxu0 0.0
  %966 = vmatprep.subr.mxu0 0.0
  %967 = vmatpush1.msra.mxu0 0.0
  %968 = vmatprep.subr.mxu0 0.0
  %969 = vmatpush1.msra.mxu0 0.0
  %970 = vmatprep.subr.mxu0 0.0
  %971 = vmatpush1.msra.mxu0 0.0
  %972 = vmatprep.subr.mxu0 0.0
  %973 = vmatpush1.msra.mxu0 0.0
  %974 = vmatprep.subr.mxu0 0.0
  %975 = vmatpush1.msra.mxu0 0.0
  %976 = vmatprep.subr.mxu0 0.0
  %977 = vmatpush1.msra.mxu0 0.0
  %978 = vmatprep.subr.mxu0 0.0
  %979 = vmatpush1.msra.mxu0 0.0
  %980 = vmatprep.subr.mxu0 0.0
  %981 = vmatpush1.msra.mxu0 0.0
  %982 = vmatprep.subr.mxu0 0.0
  %983 = vmatpush1.msra.mxu0 0.0
  %984 = vmatprep.subr.mxu0 0.0
  %985 = vmatpush1.msra.mxu0 0.0
  %986 = vmatprep.subr.mxu0 0.0
  %987 = vmatpush1.msra.mxu0 0.0
  %988 = vmatprep.subr.mxu0 0.0
  %989 = vmatpush1.msra.mxu0 0.0
  %990 = vmatprep.subr.mxu0 0.0
  %991 = vmatpush1.msra.mxu0 0.0
  %992 = vmatprep.subr.mxu0 0.0
  %993 = vmatpush1.msra.mxu0 0.0
  %994 = vmatprep.mubr.f32.mxu0 0.0
  %995 = vmatmul.mubr.f32.gmra.mrb[0].mxu0 %v928
  %v996 = vpop.f32.mrb[0].mxu0
  %v997 = vadd.f32 %v469, %v996
  %v998 = vpop.f32.mrb[0].mxu0
  %999 = vdwg.mxu0
  %v1000 = vsel %vm544, %v997, 0.0
  %1001 = vadd.xlane.f32.xlu0 %v1000
  %v1002 = vpop.xlane.xlu0 %1001
  %v1003 = vmul.f32 %v1002, %v246
  %v1004 = vsub.f32 %v997, %v1003
  %v1005 = vmul.f32 %v1004, %v1004
  %v1006 = vsel %vm544, %v1005, 0.0
  %1007 = vadd.xlane.f32.xlu0 %v1006
  %v1008 = vpop.xlane.xlu0 %1007
  %v1009 = vmul.f32 %v1008, %v246
  %v1010 = vadd.f32 %v1009, 1e-05
  %v1011 = vrsqrt.pop %v1010
  %v1012 = vmul.f32 %v1004, %v1011
  %v1013 = vmul.f32 %v1012, %v562
  %v1014 = vadd.f32 %v1013, %v569
  %v1015 = vadd.f32 %v927, %v1014
  %v1016 = vxor.u32 %v1015, 2147483648
  %v1017 = vmul.f32 %v1016, 1.442695
  %v1018 = vpow.pop %v1017
  %v1019 = vadd.f32 %v1018, 1.0
  %v1020 = vrcp.pop %v1019
  %v1021 = vmul.f32 1.0, %v1020
  %1023 = vrot.lane.b32.xlu0 %v997, 96
  %v1024 = vpop.permute.xlu0 %1023
  %v1026 = vsel %vm583, %v1024, 0.0
  %1027 = vadd.xlane.f32.xlu0 %v1026
  %v1028 = vpop.xlane.xlu0 %1027
  %v1029 = vmul.f32 %v1028, %v300
  %v1030 = vsub.f32 %v997, %v1029
  %v1031 = vmul.f32 %v1030, %v1030
  %1033 = vrot.lane.b32.xlu0 %v1031, 96
  %v1034 = vpop.permute.xlu0 %1033
  %v1036 = vsel %vm583, %v1034, 0.0
  %1037 = vadd.xlane.f32.xlu0 %v1036
  %v1038 = vpop.xlane.xlu0 %1037
  %v1039 = vmul.f32 %v1038, %v300
  %v1040 = vadd.f32 %v1039, 1e-05
  %v1041 = vrsqrt.pop %v1040
  %v1042 = vmul.f32 %v1030, %v1041
  %v1043 = vmul.f32 %v1042, %v607
  %v1044 = vadd.f32 %v1043, %v616
  %1046 = vrot.lane.b32.xlu0 %v1044, 96
  %v1047 = vpop.permute.xlu0 %1046
  %v1049 = vmul.f32 %v1021, %v1047
  %1051 = vrot.lane.b32.xlu0 %v1049, 32
  %v1052 = vpop.permute.xlu0 %1051
  %v1054 = vadd.f32 %v927, %v1052
  %v1055 = vtanh.pop %v1054
  %v1056 = vsub.f32 1.0, %v1021
  %1058 = vrot.lane.b32.xlu0 %v1055, 112
  %v1059 = vpop.permute.xlu0 %1058
  %v1061 = vmul.f32 %v1056, %v1059
  %v1062 = vmul.f32 %v1021, %v921
  %v1063 = vadd.f32 %v1061, %v1062
  %1065 = vrot.lane.b32.xlu0 %v1063, 112
  %v1066 = vpop.permute.xlu0 %1065
  %1068 = vst.msk [vmem:[#allocation3 + $0xc] sm:$0xf] %vm583, %v1066
  %v1069 = vld [vmem:[#allocation2 + $0x10] sm:$0xf]
  %v1070 = vsel %vm293, %v1066, 0
  %1072 = vmatprep.subr.mxu0 0.0
  %1073 = vmatpush1.msra.mxu0 %v457
  %1074 = vmatprep.subr.mxu0 0.0
  %1075 = vmatpush1.msra.mxu0 %v458
  %1076 = vmatprep.subr.mxu0 0.0
  %1077 = vmatpush1.msra.mxu0 0.0
  %1078 = vmatprep.subr.mxu0 0.0
  %1079 = vmatpush1.msra.mxu0 0.0
  %1080 = vmatprep.subr.mxu0 0.0
  %1081 = vmatpush1.msra.mxu0 0.0
  %1082 = vmatprep.subr.mxu0 0.0
  %1083 = vmatpush1.msra.mxu0 0.0
  %1084 = vmatprep.subr.mxu0 0.0
  %1085 = vmatpush1.msra.mxu0 0.0
  %1086 = vmatprep.subr.mxu0 0.0
  %1087 = vmatpush1.msra.mxu0 0.0
  %1088 = vmatprep.subr.mxu0 0.0
  %1089 = vmatpush1.msra.mxu0 0.0
  %1090 = vmatprep.subr.mxu0 0.0
  %1091 = vmatpush1.msra.mxu0 0.0
  %1092 = vmatprep.subr.mxu0 0.0
  %1093 = vmatpush1.msra.mxu0 0.0
  %1094 = vmatprep.subr.mxu0 0.0
  %1095 = vmatpush1.msra.mxu0 0.0
  %1096 = vmatprep.subr.mxu0 0.0
  %1097 = vmatpush1.msra.mxu0 0.0
  %1098 = vmatprep.subr.mxu0 0.0
  %1099 = vmatpush1.msra.mxu0 0.0
  %1100 = vmatprep.subr.mxu0 0.0
  %1101 = vmatpush1.msra.mxu0 0.0
  %1102 = vmatprep.subr.mxu0 0.0
  %1103 = vmatpush1.msra.mxu0 0.0
  %1104 = vmatprep.subr.mxu0 0.0
  %1105 = vmatpush1.msra.mxu0 0.0
  %1106 = vmatprep.subr.mxu0 0.0
  %1107 = vmatpush1.msra.mxu0 0.0
  %1108 = vmatprep.subr.mxu0 0.0
  %1109 = vmatpush1.msra.mxu0 0.0
  %1110 = vmatprep.subr.mxu0 0.0
  %1111 = vmatpush1.msra.mxu0 0.0
  %1112 = vmatprep.subr.mxu0 0.0
  %1113 = vmatpush1.msra.mxu0 0.0
  %1114 = vmatprep.subr.mxu0 0.0
  %1115 = vmatpush1.msra.mxu0 0.0
  %1116 = vmatprep.subr.mxu0 0.0
  %1117 = vmatpush1.msra.mxu0 0.0
  %1118 = vmatprep.subr.mxu0 0.0
  %1119 = vmatpush1.msra.mxu0 0.0
  %1120 = vmatprep.subr.mxu0 0.0
  %1121 = vmatpush1.msra.mxu0 0.0
  %1122 = vmatprep.subr.mxu0 0.0
  %1123 = vmatpush1.msra.mxu0 0.0
  %1124 = vmatprep.subr.mxu0 0.0
  %1125 = vmatpush1.msra.mxu0 0.0
  %1126 = vmatprep.subr.mxu0 0.0
  %1127 = vmatpush1.msra.mxu0 0.0
  %1128 = vmatprep.subr.mxu0 0.0
  %1129 = vmatpush1.msra.mxu0 0.0
  %1130 = vmatprep.subr.mxu0 0.0
  %1131 = vmatpush1.msra.mxu0 0.0
  %1132 = vmatprep.subr.mxu0 0.0
  %1133 = vmatpush1.msra.mxu0 0.0
  %1134 = vmatprep.subr.mxu0 0.0
  %1135 = vmatpush1.msra.mxu0 0.0
  %1136 = vmatprep.mubr.f32.mxu0 0.0
  %1137 = vmatmul.mubr.f32.gmra.mrb[0].mxu0 %v1070
  %v1138 = vpop.f32.mrb[0].mxu0
  %v1139 = vadd.f32 %v469, %v1138
  %v1140 = vpop.f32.mrb[0].mxu0
  %1141 = vdwg.mxu0
  %v1142 = vsel %vm544, %v1139, 0.0
  %1143 = vadd.xlane.f32.xlu0 %v1142
  %v1144 = vpop.xlane.xlu0 %1143
  %v1145 = vmul.f32 %v1144, %v246
  %v1146 = vsub.f32 %v1139, %v1145
  %v1147 = vmul.f32 %v1146, %v1146
  %v1148 = vsel %vm544, %v1147, 0.0
  %1149 = vadd.xlane.f32.xlu0 %v1148
  %v1150 = vpop.xlane.xlu0 %1149
  %v1151 = vmul.f32 %v1150, %v246
  %v1152 = vadd.f32 %v1151, 1e-05
  %v1153 = vrsqrt.pop %v1152
  %v1154 = vmul.f32 %v1146, %v1153
  %v1155 = vmul.f32 %v1154, %v562
  %v1156 = vadd.f32 %v1155, %v569
  %v1157 = vadd.f32 %v1069, %v1156
  %v1158 = vxor.u32 %v1157, 2147483648
  %v1159 = vmul.f32 %v1158, 1.442695
  %v1160 = vpow.pop %v1159
  %v1161 = vadd.f32 %v1160, 1.0
  %v1162 = vrcp.pop %v1161
  %v1163 = vmul.f32 1.0, %v1162
  %1165 = vrot.lane.b32.xlu0 %v1139, 96
  %v1166 = vpop.permute.xlu0 %1165
  %v1168 = vsel %vm583, %v1166, 0.0
  %1169 = vadd.xlane.f32.xlu0 %v1168
  %v1170 = vpop.xlane.xlu0 %1169
  %v1171 = vmul.f32 %v1170, %v300
  %v1172 = vsub.f32 %v1139, %v1171
  %v1173 = vmul.f32 %v1172, %v1172
  %1175 = vrot.lane.b32.xlu0 %v1173, 96
  %v1176 = vpop.permute.xlu0 %1175
  %v1178 = vsel %vm583, %v1176, 0.0
  %1179 = vadd.xlane.f32.xlu0 %v1178
  %v1180 = vpop.xlane.xlu0 %1179
  %v1181 = vmul.f32 %v1180, %v300
  %v1182 = vadd.f32 %v1181, 1e-05
  %v1183 = vrsqrt.pop %v1182
  %v1184 = vmul.f32 %v1172, %v1183
  %v1185 = vmul.f32 %v1184, %v607
  %v1186 = vadd.f32 %v1185, %v616
  %1188 = vrot.lane.b32.xlu0 %v1186, 96
  %v1189 = vpop.permute.xlu0 %1188
  %v1191 = vmul.f32 %v1163, %v1189
  %1193 = vrot.lane.b32.xlu0 %v1191, 32
  %v1194 = vpop.permute.xlu0 %1193
  %v1196 = vadd.f32 %v1069, %v1194
  %v1197 = vtanh.pop %v1196
  %v1198 = vsub.f32 1.0, %v1163
  %1200 = vrot.lane.b32.xlu0 %v1197, 112
  %v1201 = vpop.permute.xlu0 %1200
  %v1203 = vmul.f32 %v1198, %v1201
  %v1204 = vmul.f32 %v1163, %v1063
  %v1205 = vadd.f32 %v1203, %v1204
  %1207 = vrot.lane.b32.xlu0 %v1205, 112
  %v1208 = vpop.permute.xlu0 %1207
  %1210 = vst.msk [vmem:[#allocation3 + $0x10] sm:$0xf] %vm583, %v1208
  %v1211 = vld [vmem:[#allocation2 + $0x14] sm:$0xf]
  %v1212 = vsel %vm293, %v1208, 0
  %1214 = vmatprep.subr.mxu0 0.0
  %1215 = vmatpush1.msra.mxu0 %v457
  %1216 = vmatprep.subr.mxu0 0.0
  %1217 = vmatpush1.msra.mxu0 %v458
  %1218 = vmatprep.subr.mxu0 0.0
  %1219 = vmatpush1.msra.mxu0 0.0
  %1220 = vmatprep.subr.mxu0 0.0
  %1221 = vmatpush1.msra.mxu0 0.0
  %1222 = vmatprep.subr.mxu0 0.0
  %1223 = vmatpush1.msra.mxu0 0.0
  %1224 = vmatprep.subr.mxu0 0.0
  %1225 = vmatpush1.msra.mxu0 0.0
  %1226 = vmatprep.subr.mxu0 0.0
  %1227 = vmatpush1.msra.mxu0 0.0
  %1228 = vmatprep.subr.mxu0 0.0
  %1229 = vmatpush1.msra.mxu0 0.0
  %1230 = vmatprep.subr.mxu0 0.0
  %1231 = vmatpush1.msra.mxu0 0.0
  %1232 = vmatprep.subr.mxu0 0.0
  %1233 = vmatpush1.msra.mxu0 0.0
  %1234 = vmatprep.subr.mxu0 0.0
  %1235 = vmatpush1.msra.mxu0 0.0
  %1236 = vmatprep.subr.mxu0 0.0
  %1237 = vmatpush1.msra.mxu0 0.0
  %1238 = vmatprep.subr.mxu0 0.0
  %1239 = vmatpush1.msra.mxu0 0.0
  %1240 = vmatprep.subr.mxu0 0.0
  %1241 = vmatpush1.msra.mxu0 0.0
  %1242 = vmatprep.subr.mxu0 0.0
  %1243 = vmatpush1.msra.mxu0 0.0
  %1244 = vmatprep.subr.mxu0 0.0
  %1245 = vmatpush1.msra.mxu0 0.0
  %1246 = vmatprep.subr.mxu0 0.0
  %1247 = vmatpush1.msra.mxu0 0.0
  %1248 = vmatprep.subr.mxu0 0.0
  %1249 = vmatpush1.msra.mxu0 0.0
  %1250 = vmatprep.subr.mxu0 0.0
  %1251 = vmatpush1.msra.mxu0 0.0
  %1252 = vmatprep.subr.mxu0 0.0
  %1253 = vmatpush1.msra.mxu0 0.0
  %1254 = vmatprep.subr.mxu0 0.0
  %1255 = vmatpush1.msra.mxu0 0.0
  %1256 = vmatprep.subr.mxu0 0.0
  %1257 = vmatpush1.msra.mxu0 0.0
  %1258 = vmatprep.subr.mxu0 0.0
  %1259 = vmatpush1.msra.mxu0 0.0
  %1260 = vmatprep.subr.mxu0 0.0
  %1261 = vmatpush1.msra.mxu0 0.0
  %1262 = vmatprep.subr.mxu0 0.0
  %1263 = vmatpush1.msra.mxu0 0.0
  %1264 = vmatprep.subr.mxu0 0.0
  %1265 = vmatpush1.msra.mxu0 0.0
  %1266 = vmatprep.subr.mxu0 0.0
  %1267 = vmatpush1.msra.mxu0 0.0
  %1268 = vmatprep.subr.mxu0 0.0
  %1269 = vmatpush1.msra.mxu0 0.0
  %1270 = vmatprep.subr.mxu0 0.0
  %1271 = vmatpush1.msra.mxu0 0.0
  %1272 = vmatprep.subr.mxu0 0.0
  %1273 = vmatpush1.msra.mxu0 0.0
  %1274 = vmatprep.subr.mxu0 0.0
  %1275 = vmatpush1.msra.mxu0 0.0
  %1276 = vmatprep.subr.mxu0 0.0
  %1277 = vmatpush1.msra.mxu0 0.0
  %1278 = vmatprep.mubr.f32.mxu0 0.0
  %1279 = vmatmul.mubr.f32.gmra.mrb[0].mxu0 %v1212
  %v1280 = vpop.f32.mrb[0].mxu0
  %v1281 = vadd.f32 %v469, %v1280
  %v1282 = vpop.f32.mrb[0].mxu0
  %1283 = vdwg.mxu0
  %v1284 = vsel %vm544, %v1281, 0.0
  %1285 = vadd.xlane.f32.xlu0 %v1284
  %v1286 = vpop.xlane.xlu0 %1285
  %v1287 = vmul.f32 %v1286, %v246
  %v1288 = vsub.f32 %v1281, %v1287
  %v1289 = vmul.f32 %v1288, %v1288
  %v1290 = vsel %vm544, %v1289, 0.0
  %1291 = vadd.xlane.f32.xlu0 %v1290
  %v1292 = vpop.xlane.xlu0 %1291
  %v1293 = vmul.f32 %v1292, %v246
  %v1294 = vadd.f32 %v1293, 1e-05
  %v1295 = vrsqrt.pop %v1294
  %v1296 = vmul.f32 %v1288, %v1295
  %v1297 = vmul.f32 %v1296, %v562
  %v1298 = vadd.f32 %v1297, %v569
  %v1299 = vadd.f32 %v1211, %v1298
  %v1300 = vxor.u32 %v1299, 2147483648
  %v1301 = vmul.f32 %v1300, 1.442695
  %v1302 = vpow.pop %v1301
  %v1303 = vadd.f32 %v1302, 1.0
  %v1304 = vrcp.pop %v1303
  %v1305 = vmul.f32 1.0, %v1304
  %1307 = vrot.lane.b32.xlu0 %v1281, 96
  %v1308 = vpop.permute.xlu0 %1307
  %v1310 = vsel %vm583, %v1308, 0.0
  %1311 = vadd.xlane.f32.xlu0 %v1310
  %v1312 = vpop.xlane.xlu0 %1311
  %v1313 = vmul.f32 %v1312, %v300
  %v1314 = vsub.f32 %v1281, %v1313
  %v1315 = vmul.f32 %v1314, %v1314
  %1317 = vrot.lane.b32.xlu0 %v1315, 96
  %v1318 = vpop.permute.xlu0 %1317
  %v1320 = vsel %vm583, %v1318, 0.0
  %1321 = vadd.xlane.f32.xlu0 %v1320
  %v1322 = vpop.xlane.xlu0 %1321
  %v1323 = vmul.f32 %v1322, %v300
  %v1324 = vadd.f32 %v1323, 1e-05
  %v1325 = vrsqrt.pop %v1324
  %v1326 = vmul.f32 %v1314, %v1325
  %v1327 = vmul.f32 %v1326, %v607
  %v1328 = vadd.f32 %v1327, %v616
  %1330 = vrot.lane.b32.xlu0 %v1328, 96
  %v1331 = vpop.permute.xlu0 %1330
  %v1333 = vmul.f32 %v1305, %v1331
  %1335 = vrot.lane.b32.xlu0 %v1333, 32
  %v1336 = vpop.permute.xlu0 %1335
  %v1338 = vadd.f32 %v1211, %v1336
  %v1339 = vtanh.pop %v1338
  %v1340 = vsub.f32 1.0, %v1305
  %1342 = vrot.lane.b32.xlu0 %v1339, 112
  %v1343 = vpop.permute.xlu0 %1342
  %v1345 = vmul.f32 %v1340, %v1343
  %v1346 = vmul.f32 %v1305, %v1205
  %v1347 = vadd.f32 %v1345, %v1346
  %1349 = vrot.lane.b32.xlu0 %v1347, 112
  %v1350 = vpop.permute.xlu0 %1349
  %1352 = vst.msk [vmem:[#allocation3 + $0x14] sm:$0xf] %vm583, %v1350
  %v1353 = vld [vmem:[#allocation2 + $0x18] sm:$0xf]
  %v1354 = vsel %vm293, %v1350, 0
  %1356 = vmatprep.subr.mxu0 0.0
  %1357 = vmatpush1.msra.mxu0 %v457
  %1358 = vmatprep.subr.mxu0 0.0
  %1359 = vmatpush1.msra.mxu0 %v458
  %1360 = vmatprep.subr.mxu0 0.0
  %1361 = vmatpush1.msra.mxu0 0.0
  %1362 = vmatprep.subr.mxu0 0.0
  %1363 = vmatpush1.msra.mxu0 0.0
  %1364 = vmatprep.subr.mxu0 0.0
  %1365 = vmatpush1.msra.mxu0 0.0
  %1366 = vmatprep.subr.mxu0 0.0
  %1367 = vmatpush1.msra.mxu0 0.0
  %1368 = vmatprep.subr.mxu0 0.0
  %1369 = vmatpush1.msra.mxu0 0.0
  %1370 = vmatprep.subr.mxu0 0.0
  %1371 = vmatpush1.msra.mxu0 0.0
  %1372 = vmatprep.subr.mxu0 0.0
  %1373 = vmatpush1.msra.mxu0 0.0
  %1374 = vmatprep.subr.mxu0 0.0
  %1375 = vmatpush1.msra.mxu0 0.0
  %1376 = vmatprep.subr.mxu0 0.0
  %1377 = vmatpush1.msra.mxu0 0.0
  %1378 = vmatprep.subr.mxu0 0.0
  %1379 = vmatpush1.msra.mxu0 0.0
  %1380 = vmatprep.subr.mxu0 0.0
  %1381 = vmatpush1.msra.mxu0 0.0
  %1382 = vmatprep.subr.mxu0 0.0
  %1383 = vmatpush1.msra.mxu0 0.0
  %1384 = vmatprep.subr.mxu0 0.0
  %1385 = vmatpush1.msra.mxu0 0.0
  %1386 = vmatprep.subr.mxu0 0.0
  %1387 = vmatpush1.msra.mxu0 0.0
  %1388 = vmatprep.subr.mxu0 0.0
  %1389 = vmatpush1.msra.mxu0 0.0
  %1390 = vmatprep.subr.mxu0 0.0
  %1391 = vmatpush1.msra.mxu0 0.0
  %1392 = vmatprep.subr.mxu0 0.0
  %1393 = vmatpush1.msra.mxu0 0.0
  %1394 = vmatprep.subr.mxu0 0.0
  %1395 = vmatpush1.msra.mxu0 0.0
  %1396 = vmatprep.subr.mxu0 0.0
  %1397 = vmatpush1.msra.mxu0 0.0
  %1398 = vmatprep.subr.mxu0 0.0
  %1399 = vmatpush1.msra.mxu0 0.0
  %1400 = vmatprep.subr.mxu0 0.0
  %1401 = vmatpush1.msra.mxu0 0.0
  %1402 = vmatprep.subr.mxu0 0.0
  %1403 = vmatpush1.msra.mxu0 0.0
  %1404 = vmatprep.subr.mxu0 0.0
  %1405 = vmatpush1.msra.mxu0 0.0
  %1406 = vmatprep.subr.mxu0 0.0
  %1407 = vmatpush1.msra.mxu0 0.0
  %1408 = vmatprep.subr.mxu0 0.0
  %1409 = vmatpush1.msra.mxu0 0.0
  %1410 = vmatprep.subr.mxu0 0.0
  %1411 = vmatpush1.msra.mxu0 0.0
  %1412 = vmatprep.subr.mxu0 0.0
  %1413 = vmatpush1.msra.mxu0 0.0
  %1414 = vmatprep.subr.mxu0 0.0
  %1415 = vmatpush1.msra.mxu0 0.0
  %1416 = vmatprep.subr.mxu0 0.0
  %1417 = vmatpush1.msra.mxu0 0.0
  %1418 = vmatprep.subr.mxu0 0.0
  %1419 = vmatpush1.msra.mxu0 0.0
  %1420 = vmatprep.mubr.f32.mxu0 0.0
  %1421 = vmatmul.mubr.f32.gmra.mrb[0].mxu0 %v1354
  %v1422 = vpop.f32.mrb[0].mxu0
  %v1423 = vadd.f32 %v469, %v1422
  %v1424 = vpop.f32.mrb[0].mxu0
  %1425 = vdwg.mxu0
  %v1426 = vsel %vm544, %v1423, 0.0
  %1427 = vadd.xlane.f32.xlu0 %v1426
  %v1428 = vpop.xlane.xlu0 %1427
  %v1429 = vmul.f32 %v1428, %v246
  %v1430 = vsub.f32 %v1423, %v1429
  %v1431 = vmul.f32 %v1430, %v1430
  %v1432 = vsel %vm544, %v1431, 0.0
  %1433 = vadd.xlane.f32.xlu0 %v1432
  %v1434 = vpop.xlane.xlu0 %1433
  %v1435 = vmul.f32 %v1434, %v246
  %v1436 = vadd.f32 %v1435, 1e-05
  %v1437 = vrsqrt.pop %v1436
  %v1438 = vmul.f32 %v1430, %v1437
  %v1439 = vmul.f32 %v1438, %v562
  %v1440 = vadd.f32 %v1439, %v569
  %v1441 = vadd.f32 %v1353, %v1440
  %v1442 = vxor.u32 %v1441, 2147483648
  %v1443 = vmul.f32 %v1442, 1.442695
  %v1444 = vpow.pop %v1443
  %v1445 = vadd.f32 %v1444, 1.0
  %v1446 = vrcp.pop %v1445
  %v1447 = vmul.f32 1.0, %v1446
  %1449 = vrot.lane.b32.xlu0 %v1423, 96
  %v1450 = vpop.permute.xlu0 %1449
  %v1452 = vsel %vm583, %v1450, 0.0
  %1453 = vadd.xlane.f32.xlu0 %v1452
  %v1454 = vpop.xlane.xlu0 %1453
  %v1455 = vmul.f32 %v1454, %v300
  %v1456 = vsub.f32 %v1423, %v1455
  %v1457 = vmul.f32 %v1456, %v1456
  %1459 = vrot.lane.b32.xlu0 %v1457, 96
  %v1460 = vpop.permute.xlu0 %1459
  %v1462 = vsel %vm583, %v1460, 0.0
  %1463 = vadd.xlane.f32.xlu0 %v1462
  %v1464 = vpop.xlane.xlu0 %1463
  %v1465 = vmul.f32 %v1464, %v300
  %v1466 = vadd.f32 %v1465, 1e-05
  %v1467 = vrsqrt.pop %v1466
  %v1468 = vmul.f32 %v1456, %v1467
  %v1469 = vmul.f32 %v1468, %v607
  %v1470 = vadd.f32 %v1469, %v616
  %1472 = vrot.lane.b32.xlu0 %v1470, 96
  %v1473 = vpop.permute.xlu0 %1472
  %v1475 = vmul.f32 %v1447, %v1473
  %1477 = vrot.lane.b32.xlu0 %v1475, 32
  %v1478 = vpop.permute.xlu0 %1477
  %v1480 = vadd.f32 %v1353, %v1478
  %v1481 = vtanh.pop %v1480
  %v1482 = vsub.f32 1.0, %v1447
  %1484 = vrot.lane.b32.xlu0 %v1481, 112
  %v1485 = vpop.permute.xlu0 %1484
  %v1487 = vmul.f32 %v1482, %v1485
  %v1488 = vmul.f32 %v1447, %v1347
  %v1489 = vadd.f32 %v1487, %v1488
  %1491 = vrot.lane.b32.xlu0 %v1489, 112
  %v1492 = vpop.permute.xlu0 %1491
  %1494 = vst.msk [vmem:[#allocation3 + $0x18] sm:$0xf] %vm583, %v1492
  %v1495 = vld [vmem:[#allocation2 + $0x1c] sm:$0xf]
  %v1496 = vsel %vm293, %v1492, 0
  %1498 = vmatprep.subr.mxu0 0.0
  %1499 = vmatpush1.msra.mxu0 %v457
  %1500 = vmatprep.subr.mxu0 0.0
  %1501 = vmatpush1.msra.mxu0 %v458
  %1502 = vmatprep.subr.mxu0 0.0
  %1503 = vmatpush1.msra.mxu0 0.0
  %1504 = vmatprep.subr.mxu0 0.0
  %1505 = vmatpush1.msra.mxu0 0.0
  %1506 = vmatprep.subr.mxu0 0.0
  %1507 = vmatpush1.msra.mxu0 0.0
  %1508 = vmatprep.subr.mxu0 0.0
  %1509 = vmatpush1.msra.mxu0 0.0
  %1510 = vmatprep.subr.mxu0 0.0
  %1511 = vmatpush1.msra.mxu0 0.0
  %1512 = vmatprep.subr.mxu0 0.0
  %1513 = vmatpush1.msra.mxu0 0.0
  %1514 = vmatprep.subr.mxu0 0.0
  %1515 = vmatpush1.msra.mxu0 0.0
  %1516 = vmatprep.subr.mxu0 0.0
  %1517 = vmatpush1.msra.mxu0 0.0
  %1518 = vmatprep.subr.mxu0 0.0
  %1519 = vmatpush1.msra.mxu0 0.0
  %1520 = vmatprep.subr.mxu0 0.0
  %1521 = vmatpush1.msra.mxu0 0.0
  %1522 = vmatprep.subr.mxu0 0.0
  %1523 = vmatpush1.msra.mxu0 0.0
  %1524 = vmatprep.subr.mxu0 0.0
  %1525 = vmatpush1.msra.mxu0 0.0
  %1526 = vmatprep.subr.mxu0 0.0
  %1527 = vmatpush1.msra.mxu0 0.0
  %1528 = vmatprep.subr.mxu0 0.0
  %1529 = vmatpush1.msra.mxu0 0.0
  %1530 = vmatprep.subr.mxu0 0.0
  %1531 = vmatpush1.msra.mxu0 0.0
  %1532 = vmatprep.subr.mxu0 0.0
  %1533 = vmatpush1.msra.mxu0 0.0
  %1534 = vmatprep.subr.mxu0 0.0
  %1535 = vmatpush1.msra.mxu0 0.0
  %1536 = vmatprep.subr.mxu0 0.0
  %1537 = vmatpush1.msra.mxu0 0.0
  %1538 = vmatprep.subr.mxu0 0.0
  %1539 = vmatpush1.msra.mxu0 0.0
  %1540 = vmatprep.subr.mxu0 0.0
  %1541 = vmatpush1.msra.mxu0 0.0
  %1542 = vmatprep.subr.mxu0 0.0
  %1543 = vmatpush1.msra.mxu0 0.0
  %1544 = vmatprep.subr.mxu0 0.0
  %1545 = vmatpush1.msra.mxu0 0.0
  %1546 = vmatprep.subr.mxu0 0.0
  %1547 = vmatpush1.msra.mxu0 0.0
  %1548 = vmatprep.subr.mxu0 0.0
  %1549 = vmatpush1.msra.mxu0 0.0
  %1550 = vmatprep.subr.mxu0 0.0
  %1551 = vmatpush1.msra.mxu0 0.0
  %1552 = vmatprep.subr.mxu0 0.0
  %1553 = vmatpush1.msra.mxu0 0.0
  %1554 = vmatprep.subr.mxu0 0.0
  %1555 = vmatpush1.msra.mxu0 0.0
  %1556 = vmatprep.subr.mxu0 0.0
  %1557 = vmatpush1.msra.mxu0 0.0
  %1558 = vmatprep.subr.mxu0 0.0
  %1559 = vmatpush1.msra.mxu0 0.0
  %1560 = vmatprep.subr.mxu0 0.0
  %1561 = vmatpush1.msra.mxu0 0.0
  %1562 = vmatprep.mubr.f32.mxu0 0.0
  %1563 = vmatmul.mubr.f32.gmra.mrb[0].mxu0 %v1496
  %v1564 = vpop.f32.mrb[0].mxu0
  %v1565 = vadd.f32 %v469, %v1564
  %v1566 = vpop.f32.mrb[0].mxu0
  %1567 = vdwg.mxu0
  %v1568 = vsel %vm544, %v1565, 0.0
  %1569 = vadd.xlane.f32.xlu0 %v1568
  %v1570 = vpop.xlane.xlu0 %1569
  %v1571 = vmul.f32 %v1570, %v246
  %v1572 = vsub.f32 %v1565, %v1571
  %v1573 = vmul.f32 %v1572, %v1572
  %v1574 = vsel %vm544, %v1573, 0.0
  %1575 = vadd.xlane.f32.xlu0 %v1574
  %v1576 = vpop.xlane.xlu0 %1575
  %v1577 = vmul.f32 %v1576, %v246
  %v1578 = vadd.f32 %v1577, 1e-05
  %v1579 = vrsqrt.pop %v1578
  %v1580 = vmul.f32 %v1572, %v1579
  %v1581 = vmul.f32 %v1580, %v562
  %v1582 = vadd.f32 %v1581, %v569
  %v1583 = vadd.f32 %v1495, %v1582
  %v1584 = vxor.u32 %v1583, 2147483648
  %v1585 = vmul.f32 %v1584, 1.442695
  %v1586 = vpow.pop %v1585
  %v1587 = vadd.f32 %v1586, 1.0
  %v1588 = vrcp.pop %v1587
  %v1589 = vmul.f32 1.0, %v1588
  %1591 = vrot.lane.b32.xlu0 %v1565, 96
  %v1592 = vpop.permute.xlu0 %1591
  %v1594 = vsel %vm583, %v1592, 0.0
  %1595 = vadd.xlane.f32.xlu0 %v1594
  %v1596 = vpop.xlane.xlu0 %1595
  %v1597 = vmul.f32 %v1596, %v300
  %v1598 = vsub.f32 %v1565, %v1597
  %v1599 = vmul.f32 %v1598, %v1598
  %1601 = vrot.lane.b32.xlu0 %v1599, 96
  %v1602 = vpop.permute.xlu0 %1601
  %v1604 = vsel %vm583, %v1602, 0.0
  %1605 = vadd.xlane.f32.xlu0 %v1604
  %v1606 = vpop.xlane.xlu0 %1605
  %v1607 = vmul.f32 %v1606, %v300
  %v1608 = vadd.f32 %v1607, 1e-05
  %v1609 = vrsqrt.pop %v1608
  %v1610 = vmul.f32 %v1598, %v1609
  %v1611 = vmul.f32 %v1610, %v607
  %v1612 = vadd.f32 %v1611, %v616
  %1614 = vrot.lane.b32.xlu0 %v1612, 96
  %v1615 = vpop.permute.xlu0 %1614
  %v1617 = vmul.f32 %v1589, %v1615
  %1619 = vrot.lane.b32.xlu0 %v1617, 32
  %v1620 = vpop.permute.xlu0 %1619
  %v1622 = vadd.f32 %v1495, %v1620
  %v1623 = vtanh.pop %v1622
  %v1624 = vsub.f32 1.0, %v1589
  %1626 = vrot.lane.b32.xlu0 %v1623, 112
  %v1627 = vpop.permute.xlu0 %1626
  %v1629 = vmul.f32 %v1624, %v1627
  %v1630 = vmul.f32 %v1589, %v1489
  %v1631 = vadd.f32 %v1629, %v1630
  %1633 = vrot.lane.b32.xlu0 %v1631, 112
  %v1634 = vpop.permute.xlu0 %1633
  %1636 = vst.msk [vmem:[#allocation3 + $0x1c] sm:$0xf] %vm583, %v1634
  %v1637 = vld [vmem:[#allocation3] sm:$0xff]
  %v1638 = vld [vmem:[#allocation3 + $0x8] sm:$0xff]
  %v1639 = vld [vmem:[#allocation3 + $0x10] sm:$0xff]
  %v1640 = vld [vmem:[#allocation3 + $0x18] sm:$0xff]
  %v1641 = vld [vmem:[%s18] sm:$0xff]
  %v1642 = vld [vmem:[%s18 + $0x8] sm:$0xff]
  %v1644 = vsel %vm239, %v1641, 0
  %v1647 = vsel %vm239, %v1642, 0
  %1649 = vmatprep.subr.mxu0 0.0
  %1650 = vmatpush1.msra.mxu0 %v1637
  %1651 = vmatprep.subr.mxu0 0.0
  %1652 = vmatpush1.msra.mxu0 %v1638
  %1653 = vmatprep.subr.mxu0 0.0
  %1654 = vmatpush1.msra.mxu0 %v1639
  %1655 = vmatprep.subr.mxu0 0.0
  %1656 = vmatpush1.msra.mxu0 %v1640
  %1657 = vmatprep.subr.mxu0 0.0
  %1658 = vmatpush1.msra.mxu0 0.0
  %1659 = vmatprep.subr.mxu0 0.0
  %1660 = vmatpush1.msra.mxu0 0.0
  %1661 = vmatprep.subr.mxu0 0.0
  %1662 = vmatpush1.msra.mxu0 0.0
  %1663 = vmatprep.subr.mxu0 0.0
  %1664 = vmatpush1.msra.mxu0 0.0
  %1665 = vmatprep.subr.mxu0 0.0
  %1666 = vmatpush1.msra.mxu0 0.0
  %1667 = vmatprep.subr.mxu0 0.0
  %1668 = vmatpush1.msra.mxu0 0.0
  %1669 = vmatprep.subr.mxu0 0.0
  %1670 = vmatpush1.msra.mxu0 0.0
  %1671 = vmatprep.subr.mxu0 0.0
  %1672 = vmatpush1.msra.mxu0 0.0
  %1673 = vmatprep.subr.mxu0 0.0
  %1674 = vmatpush1.msra.mxu0 0.0
  %1675 = vmatprep.subr.mxu0 0.0
  %1676 = vmatpush1.msra.mxu0 0.0
  %1677 = vmatprep.subr.mxu0 0.0
  %1678 = vmatpush1.msra.mxu0 0.0
  %1679 = vmatprep.subr.mxu0 0.0
  %1680 = vmatpush1.msra.mxu0 0.0
  %1681 = vmatprep.subr.mxu0 0.0
  %1682 = vmatpush1.msra.mxu0 0.0
  %1683 = vmatprep.subr.mxu0 0.0
  %1684 = vmatpush1.msra.mxu0 0.0
  %1685 = vmatprep.subr.mxu0 0.0
  %1686 = vmatpush1.msra.mxu0 0.0
  %1687 = vmatprep.subr.mxu0 0.0
  %1688 = vmatpush1.msra.mxu0 0.0
  %1689 = vmatprep.subr.mxu0 0.0
  %1690 = vmatpush1.msra.mxu0 0.0
  %1691 = vmatprep.subr.mxu0 0.0
  %1692 = vmatpush1.msra.mxu0 0.0
  %1693 = vmatprep.subr.mxu0 0.0
  %1694 = vmatpush1.msra.mxu0 0.0
  %1695 = vmatprep.subr.mxu0 0.0
  %1696 = vmatpush1.msra.mxu0 0.0
  %1697 = vmatprep.subr.mxu0 0.0
  %1698 = vmatpush1.msra.mxu0 0.0
  %1699 = vmatprep.subr.mxu0 0.0
  %1700 = vmatpush1.msra.mxu0 0.0
  %1701 = vmatprep.subr.mxu0 0.0
  %1702 = vmatpush1.msra.mxu0 0.0
  %1703 = vmatprep.subr.mxu0 0.0
  %1704 = vmatpush1.msra.mxu0 0.0
  %1705 = vmatprep.subr.mxu0 0.0
  %1706 = vmatpush1.msra.mxu0 0.0
  %1707 = vmatprep.subr.mxu0 0.0
  %1708 = vmatpush1.msra.mxu0 0.0
  %1709 = vmatprep.subr.mxu0 0.0
  %1710 = vmatpush1.msra.mxu0 0.0
  %1711 = vmatprep.subr.mxu0 0.0
  %1712 = vmatpush1.msra.mxu0 0.0
  %1713 = vmatprep.mubr.f32.mxu0 0.0
  %1714 = vmatmul.mubr.f32.gmra.mrb[0].mxu0 %v1644
  %v1715 = vpop.f32.mrb[0].mxu0
  %v1716 = vadd.f32 0.0, %v1715
  %v1717 = vpop.f32.mrb[0].mxu0
  %1718 = vmatprep.mubr.f32.mxu0 0.0
  %1719 = vmatmul.mubr.f32.gmra.mrb[0].mxu0 %v1647
  %v1720 = vpop.f32.mrb[0].mxu0
  %v1721 = vadd.f32 0.0, %v1720
  %v1722 = vpop.f32.mrb[0].mxu0
  %1723 = vdwg.mxu0
  %v1724 = vld [vmem:[%s19] sm:$0xff]
  %v1725 = vld [vmem:[%s19 + $0x8] sm:$0xff]
  %v1727 = vsel %vm239, %v1724, 0
  %v1730 = vsel %vm239, %v1725, 0
  %1732 = vmatprep.subr.mxu0 0.0
  %1733 = vmatpush1.msra.mxu0 %v1637
  %1734 = vmatprep.subr.mxu0 0.0
  %1735 = vmatpush1.msra.mxu0 %v1638
  %1736 = vmatprep.subr.mxu0 0.0
  %1737 = vmatpush1.msra.mxu0 %v1639
  %1738 = vmatprep.subr.mxu0 0.0
  %1739 = vmatpush1.msra.mxu0 %v1640
  %1740 = vmatprep.subr.mxu0 0.0
  %1741 = vmatpush1.msra.mxu0 0.0
  %1742 = vmatprep.subr.mxu0 0.0
  %1743 = vmatpush1.msra.mxu0 0.0
  %1744 = vmatprep.subr.mxu0 0.0
  %1745 = vmatpush1.msra.mxu0 0.0
  %1746 = vmatprep.subr.mxu0 0.0
  %1747 = vmatpush1.msra.mxu0 0.0
  %1748 = vmatprep.subr.mxu0 0.0
  %1749 = vmatpush1.msra.mxu0 0.0
  %1750 = vmatprep.subr.mxu0 0.0
  %1751 = vmatpush1.msra.mxu0 0.0
  %1752 = vmatprep.subr.mxu0 0.0
  %1753 = vmatpush1.msra.mxu0 0.0
  %1754 = vmatprep.subr.mxu0 0.0
  %1755 = vmatpush1.msra.mxu0 0.0
  %1756 = vmatprep.subr.mxu0 0.0
  %1757 = vmatpush1.msra.mxu0 0.0
  %1758 = vmatprep.subr.mxu0 0.0
  %1759 = vmatpush1.msra.mxu0 0.0
  %1760 = vmatprep.subr.mxu0 0.0
  %1761 = vmatpush1.msra.mxu0 0.0
  %1762 = vmatprep.subr.mxu0 0.0
  %1763 = vmatpush1.msra.mxu0 0.0
  %1764 = vmatprep.subr.mxu0 0.0
  %1765 = vmatpush1.msra.mxu0 0.0
  %1766 = vmatprep.subr.mxu0 0.0
  %1767 = vmatpush1.msra.mxu0 0.0
  %1768 = vmatprep.subr.mxu0 0.0
  %1769 = vmatpush1.msra.mxu0 0.0
  %1770 = vmatprep.subr.mxu0 0.0
  %1771 = vmatpush1.msra.mxu0 0.0
  %1772 = vmatprep.subr.mxu0 0.0
  %1773 = vmatpush1.msra.mxu0 0.0
  %1774 = vmatprep.subr.mxu0 0.0
  %1775 = vmatpush1.msra.mxu0 0.0
  %1776 = vmatprep.subr.mxu0 0.0
  %1777 = vmatpush1.msra.mxu0 0.0
  %1778 = vmatprep.subr.mxu0 0.0
  %1779 = vmatpush1.msra.mxu0 0.0
  %1780 = vmatprep.subr.mxu0 0.0
  %1781 = vmatpush1.msra.mxu0 0.0
  %1782 = vmatprep.subr.mxu0 0.0
  %1783 = vmatpush1.msra.mxu0 0.0
  %1784 = vmatprep.subr.mxu0 0.0
  %1785 = vmatpush1.msra.mxu0 0.0
  %1786 = vmatprep.subr.mxu0 0.0
  %1787 = vmatpush1.msra.mxu0 0.0
  %1788 = vmatprep.subr.mxu0 0.0
  %1789 = vmatpush1.msra.mxu0 0.0
  %1790 = vmatprep.subr.mxu0 0.0
  %1791 = vmatpush1.msra.mxu0 0.0
  %1792 = vmatprep.subr.mxu0 0.0
  %1793 = vmatpush1.msra.mxu0 0.0
  %1794 = vmatprep.subr.mxu0 0.0
  %1795 = vmatpush1.msra.mxu0 0.0
  %1796 = vmatprep.mubr.f32.mxu0 0.0
  %1797 = vmatmul.mubr.f32.gmra.mrb[0].mxu0 %v1727
  %v1798 = vpop.f32.mrb[0].mxu0
  %v1799 = vadd.f32 0.0, %v1798
  %v1800 = vpop.f32.mrb[0].mxu0
  %1801 = vmatprep.mubr.f32.mxu0 0.0
  %1802 = vmatmul.mubr.f32.gmra.mrb[0].mxu0 %v1730
  %v1803 = vpop.f32.mrb[0].mxu0
  %v1804 = vadd.f32 0.0, %v1803
  %v1805 = vpop.f32.mrb[0].mxu0
  %1806 = vdwg.mxu0
  %1809 = vrot.lane.b32.xlu0 %v1799, 16
  %v1810 = vpop.permute.xlu0 %1809
  %1811 = vrot.lane.b32.xlu0 %v1804, 16
  %v1812 = vpop.permute.xlu0 %1811
  %v1815 = vsel %vm293, %v1716, %v1810
  %v1816 = vsel %vm293, %v1721, %v1812
  %v1817 = vld [vmem:[%s15] sm:$0x1]
  %v1818 = vld [vmem:[%s16] sm:$0x1]
  %v1819 = vsel %vm239, %v1815, 0.0
  %1820 = vadd.xlane.f32.xlu0 %v1819
  %v1821 = vpop.xlane.xlu0 %1820
  %v1822 = vsel %vm239, %v1816, 0.0
  %1823 = vadd.xlane.f32.xlu0 %v1822
  %v1824 = vpop.xlane.xlu0 %1823
  %v1825 = vmul.f32 %v1821, %v246
  %v1826 = vmul.f32 %v1824, %v246
  %v1827 = vsub.f32 %v1815, %v1825
  %v1828 = vsub.f32 %v1816, %v1826
  %v1829 = vmul.f32 %v1827, %v1827
  %v1830 = vmul.f32 %v1828, %v1828
  %v1831 = vsel %vm239, %v1829, 0.0
  %1832 = vadd.xlane.f32.xlu0 %v1831
  %v1833 = vpop.xlane.xlu0 %1832
  %v1834 = vsel %vm239, %v1830, 0.0
  %1835 = vadd.xlane.f32.xlu0 %v1834
  %v1836 = vpop.xlane.xlu0 %1835
  %v1837 = vmul.f32 %v1833, %v246
  %v1838 = vmul.f32 %v1836, %v246
  %v1839 = vadd.f32 %v1837, 1e-05
  %v1840 = vadd.f32 %v1838, 1e-05
  %v1841 = vrsqrt.pop %v1839
  %v1842 = vrsqrt.pop %v1840
  %v1843 = vmul.f32 %v1827, %v1841
  %v1844 = vmul.f32 %v1828, %v1842
  %v1846 = vlaneseq
  %v1847 = vshrl.u32 %v1846, 7
  %v1848 = vsub.s32 0, %v1847
  %v1849 = vrot.slane %v1817, %v1848
  %v1851 = vmul.f32 %v1843, %v1849
  %v1852 = vmul.f32 %v1844, %v1849
  %v1854 = vlaneseq
  %v1855 = vshrl.u32 %v1854, 7
  %v1856 = vsub.s32 0, %v1855
  %v1857 = vrot.slane %v1818, %v1856
  %v1859 = vadd.f32 %v1851, %v1857
  %v1860 = vadd.f32 %v1852, %v1857
  %1861 = vst.msk [vmem:[%s20] sm:$0xff] %vm239, %v1859
  %1862 = vst.msk [vmem:[%s20 + $0x8] sm:$0xff] %vm239, %v1860
  // Predicated region
  $region82: #{cnn_bigru_forward.1} parent=0 // pred_check
    _
  $region83: #{cnn_bigru_forward.1} parent=0 // pred_check_branch
    %1864 = sbr.rel (0) target = $region85
  $region84: #{cnn_bigru_forward.1} parent=0 // pred_region
    _
  $region85: #{cnn_bigru_forward.1} parent=0 // pred_fallthru
    _
  // Predicated region
  $region86: #{cnn_bigru_forward.1} parent=0 // pred_check
    _
  $region87: #{cnn_bigru_forward.1} parent=0 // pred_check_branch
    %1866 = sbr.rel (0) target = $region89
  $region88: #{cnn_bigru_forward.1} parent=0 // pred_region
    _
  $region89: #{cnn_bigru_forward.1} parent=0 // pred_fallthru
    _

</llo_original>
